<compile_context>
chip_gen: v7x
topology: tpu7x:2x2x1
jax: 0.10.0
libtpu: 0.0.40
codegen_flags: <defaults>
</compile_context>

<pallas_src>
import functools

import jax
import jax.numpy as jnp
from jax import lax
from jax.experimental import pallas as pl
from jax.experimental.pallas import tpu as pltpu

BN_EPS = 1e-5
LANE = 128                  # all padded dims are multiples of the TPU lane width
C2 = 16                     # conv2 output channels (model constant)
FC1_OUT, FC2_OUT = 120, 84


def _round_up(x, m):
    return (x + m - 1) // m * m


def _vmem_spec():
    return pl.BlockSpec(memory_space=pltpu.MemorySpace.VMEM)


# ---------------------------------------------------------------------------
# Kernel 1: conv1 block = im2col GEMM + BatchNorm(batch stats) + ReLU + 2x2 MaxPool
# ---------------------------------------------------------------------------
def _conv1_block_kernel(p_ref, w_ref, g_ref, b_ref, o_ref, *, mp_pad, n_real):
    """p_ref: (K1, 4*mp_pad) bf16, four zero-padded pool-corner column blocks.
    w_ref: (C1, K1) bf16. g_ref/b_ref: (C1, 1) f32. o_ref: (C1, mp_pad) bf16."""
    # One wide GEMM for all four pool corners (zero-padded columns contribute 0).
    y = jnp.dot(w_ref[...], p_ref[...], preferred_element_type=jnp.float32)
    # Single-pass batch statistics per channel (padded columns are exactly zero).
    s1 = jnp.sum(y, axis=1, keepdims=True)
    s2 = jnp.sum(y * y, axis=1, keepdims=True)
    mu = s1 * (1.0 / n_real)
    var = s2 * (1.0 / n_real) - mu * mu
    scale = g_ref[...] * lax.rsqrt(var + BN_EPS)       # gamma folded into the scale
    shift = b_ref[...] - mu * scale                    # (y-mu)*s + beta == y*s + shift
    # 2x2 max-pool = max over the four lane-tile-aligned corner blocks.  Scale stays
    # inside the max (gamma may be negative); shift + ReLU hoisted out of it.
    m = jnp.maximum(
        jnp.maximum(y[:, 0 * mp_pad:1 * mp_pad] * scale, y[:, 1 * mp_pad:2 * mp_pad] * scale),
        jnp.maximum(y[:, 2 * mp_pad:3 * mp_pad] * scale, y[:, 3 * mp_pad:4 * mp_pad] * scale))
    o_ref[...] = jnp.maximum(m + shift, 0.0).astype(o_ref.dtype)


# ---------------------------------------------------------------------------
# Kernel 2: conv2 block + fc1 + fc2 + classifier, fully fused
# ---------------------------------------------------------------------------
def _conv2_mlp_kernel(p_ref, w2_ref, g2_ref, b2_ref,
                      w_fc1_ref, b_fc1_ref, w_fc2_ref, b_fc2_ref,
                      w_cls_ref, b_cls_ref,
                      x2_ref, x3_ref, x4_ref, logits_ref, *, batch, mp2):
    """p_ref: (4*mp2, K2) bf16, rows ordered (pool-corner, b, ph, pw).
    w2_ref: (K2, 128) bf16 (conv2 channels zero-padded to 128 lanes).
    Outputs: x2 (mp2, 128) f32, x3/x4/logits (batch, 128) f32 (all lane-dense)."""
    # ---- conv2: one GEMM, channels on lanes (padded to 128 -> lane-dense) ----
    y = jnp.dot(p_ref[...], w2_ref[...], preferred_element_type=jnp.float32)  # (4*mp2, 128)
    n = 4.0 * mp2                                     # = B*OH2*OW2 (all rows are real)
    s1 = jnp.sum(y, axis=0, keepdims=True)
    s2 = jnp.sum(y * y, axis=0, keepdims=True)
    mu = s1 * (1.0 / n)
    var = s2 * (1.0 / n) - mu * mu
    scale = g2_ref[...] * lax.rsqrt(var + BN_EPS)
    shift = b2_ref[...] - mu * scale
    # 2x2 max-pool over the four sublane-aligned corner row blocks; shift/ReLU hoisted.
    m = jnp.maximum(
        jnp.maximum(y[0 * mp2:1 * mp2] * scale, y[1 * mp2:2 * mp2] * scale),
        jnp.maximum(y[2 * mp2:3 * mp2] * scale, y[3 * mp2:4 * mp2] * scale))
    a2 = jnp.maximum(m + shift, 0.0)                  # (mp2, 128) f32, pad lanes == 0
    x2_ref[...] = a2                                  # lane-dense store (side output)

    # ---- MLP (conv2->fc1 relayout already folded into w_fc1: row order (ph,pw,c_pad)) ----
    flat = a2.reshape(batch, -1).astype(jnp.bfloat16)          # (B, PH*PW*128)
    h1 = jnp.maximum(
        jnp.dot(flat, w_fc1_ref[...], preferred_element_type=jnp.float32) + b_fc1_ref[...], 0.0)
    x3_ref[...] = h1
    h2 = jnp.maximum(
        jnp.dot(h1.astype(jnp.bfloat16), w_fc2_ref[...],
                preferred_element_type=jnp.float32) + b_fc2_ref[...], 0.0)
    x4_ref[...] = h2
    logits_ref[...] = (
        jnp.dot(h2.astype(jnp.bfloat16), w_cls_ref[...],
                preferred_element_type=jnp.float32) + b_cls_ref[...])


# ---------------------------------------------------------------------------
# pallas_call wrappers (whole-array VMEM residency; gridless at these shapes)
# ---------------------------------------------------------------------------
def conv1_block(x, w1, g1, b1, kh=5, kw=5):
    """x: (B, Cin, H, W) f32.  Returns pooled conv1 activation (C1, B, PH, PW) bf16."""
    B, Cin, H, W = x.shape
    OH, OW = H - kh + 1, W - kw + 1
    assert OH % 2 == 0 and OW % 2 == 0, "MaxPool2d(2) expects even conv output dims"
    PH, PW = OH // 2, OW // 2
    K = Cin * kh * kw
    Mp = B * PH * PW
    Mp_pad = _round_up(Mp, LANE)
    C1 = w1.shape[0]

    # Single patches op (im2col): (B, K, OH, OW); K ordered (cin, kh, kw) -> matches
    # the torch conv weight reshape.
    pat = lax.conv_general_dilated_patches(
        x.astype(jnp.bfloat16), (kh, kw), (1, 1), "VALID",
        dimension_numbers=("NCHW", "OIHW", "NCHW"))
    pat = jnp.transpose(pat, (1, 0, 2, 3))                                 # (K, B, OH, OW)
    # Split into the four 2x2 pool corners; pad each to a lane-aligned block and
    # concatenate into ONE wide RHS so the kernel issues a single GEMM.
    corners = jnp.stack([pat[:, :, di::2, dj::2].reshape(K, Mp)
                         for di in (0, 1) for dj in (0, 1)], axis=1)       # (K, 4, Mp)
    wide = jnp.pad(corners, ((0, 0), (0, 0), (0, Mp_pad - Mp))).reshape(K, 4 * Mp_pad)

    kern = functools.partial(_conv1_block_kernel, mp_pad=Mp_pad, n_real=float(B * OH * OW))
    out = pl.pallas_call(
        kern,
        out_shape=jax.ShapeDtypeStruct((C1, Mp_pad), jnp.bfloat16),
        in_specs=[_vmem_spec()] * 4,
        out_specs=_vmem_spec(),
    )(wide, w1, g1, b1)
    return out[:, :Mp].reshape(C1, B, PH, PW)


def conv2_mlp_block(a1, params, kh=5, kw=5):
    """a1: (C1, B, H1, W1) bf16 pooled conv1 activation.  Returns padded kernel outputs."""
    C1, B, H1, W1 = a1.shape
    OH, OW = H1 - kh + 1, W1 - kw + 1
    assert OH % 2 == 0 and OW % 2 == 0
    PH, PW = OH // 2, OW // 2
    K = C1 * kh * kw
    Mp = B * PH * PW

    a1_nchw = jnp.transpose(a1, (1, 0, 2, 3))                              # (B, C1, H1, W1)
    pat = lax.conv_general_dilated_patches(
        a1_nchw, (kh, kw), (1, 1), "VALID",
        dimension_numbers=("NCHW", "OIHW", "NCHW"))                        # (B, K, OH, OW)
    pat = jnp.transpose(pat, (0, 2, 3, 1))                                 # (B, OH, OW, K)
    rows = jnp.stack([pat[:, di::2, dj::2, :] for di in (0, 1) for dj in (0, 1)],
                     axis=0).reshape(4 * Mp, K)                            # (corner,b,ph,pw) rows

    kern = functools.partial(_conv2_mlp_kernel, batch=B, mp2=Mp)
    out_shapes = (
        jax.ShapeDtypeStruct((Mp, LANE), jnp.float32),    # pooled conv2 (padded channels)
        jax.ShapeDtypeStruct((B, LANE), jnp.float32),     # fc1 output (padded to 128)
        jax.ShapeDtypeStruct((B, LANE), jnp.float32),     # fc2 output (padded to 128)
        jax.ShapeDtypeStruct((B, LANE), jnp.float32),     # logits     (padded to 128)
    )
    return pl.pallas_call(
        kern,
        out_shape=out_shapes,
        in_specs=[_vmem_spec()] * 10,
        out_specs=tuple(_vmem_spec() for _ in range(4)),
    )(rows, params["conv2_w"], params["bn2_g"], params["bn2_b"],
      params["fc1_w"], params["fc1_b"], params["fc2_w"], params["fc2_b"],
      params["cls_w"], params["cls_b"])


# ---------------------------------------------------------------------------
# Parameters: PyTorch layouts + one-time conversion to kernel-ready layouts
# ---------------------------------------------------------------------------
def init_torch_params(key, cin=1, fc1_in=256, num_classes=10):
    ks = jax.random.split(key, 14)
    s = 0.1
    return {
        "conv1_w": s * jax.random.normal(ks[0], (6, cin, 5, 5), jnp.float32),
        "conv1_b": s * jax.random.normal(ks[1], (6,), jnp.float32),
        "bn1_g": 1.0 + s * jax.random.normal(ks[2], (6,), jnp.float32),
        "bn1_b": s * jax.random.normal(ks[3], (6,), jnp.float32),
        "conv2_w": s * jax.random.normal(ks[4], (16, 6, 5, 5), jnp.float32),
        "conv2_b": s * jax.random.normal(ks[5], (16,), jnp.float32),
        "bn2_g": 1.0 + s * jax.random.normal(ks[6], (16,), jnp.float32),
        "bn2_b": s * jax.random.normal(ks[7], (16,), jnp.float32),
        "fc1_w": s * jax.random.normal(ks[8], (120, fc1_in), jnp.float32),
        "fc1_b": s * jax.random.normal(ks[9], (120,), jnp.float32),
        "fc2_w": s * jax.random.normal(ks[10], (84, 120), jnp.float32),
        "fc2_b": s * jax.random.normal(ks[11], (84,), jnp.float32),
        "cls_w": s * jax.random.normal(ks[12], (num_classes, 84), jnp.float32),
        "cls_b": s * jax.random.normal(ks[13], (num_classes,), jnp.float32),
    }


def prepare_params(tp, num_classes=10):
    """One-time layout conversion (outside jit). Conv biases dropped (cancelled by BN);
    conv2/fc dims zero-padded to 128 lanes; conv2->fc1 relayout folded into fc1 weight."""
    c2 = tp["conv2_w"].shape[0]
    # conv1 (transposed GEMM): (C1, K1)
    w1 = tp["conv1_w"].reshape(tp["conv1_w"].shape[0], -1).astype(jnp.bfloat16)
    g1 = tp["bn1_g"].reshape(-1, 1).astype(jnp.float32)
    b1 = tp["bn1_b"].reshape(-1, 1).astype(jnp.float32)
    # conv2 (non-transposed GEMM): (K2, 128); padded channels stay exactly zero.
    w2 = jnp.pad(tp["conv2_w"].reshape(c2, -1).T, ((0, 0), (0, LANE - c2))).astype(jnp.bfloat16)
    g2 = jnp.pad(tp["bn2_g"], (0, LANE - c2)).reshape(1, -1).astype(jnp.float32)
    b2 = jnp.pad(tp["bn2_b"], (0, LANE - c2)).reshape(1, -1).astype(jnp.float32)
    # fc1: torch flatten order is (c, ph, pw); kernel flattens as (ph, pw, c_pad).
    d_fc1, d_in = tp["fc1_w"].shape            # (120, 256)
    hw = d_in // c2                            # PH2*PW2 = 16
    fw1 = tp["fc1_w"].T.reshape(c2, hw, d_fc1)            # (c, hw, 120)
    fw1 = jnp.transpose(fw1, (1, 0, 2))                   # (hw, c, 120)
    fw1 = jnp.pad(fw1, ((0, 0), (0, LANE - c2), (0, LANE - d_fc1)))
    fw1 = fw1.reshape(hw * LANE, LANE).astype(jnp.bfloat16)
    fb1 = jnp.pad(tp["fc1_b"], (0, LANE - d_fc1)).reshape(1, -1).astype(jnp.float32)
    # fc2 / classifier: transpose + zero-pad to (128, 128).
    d_fc2 = tp["fc2_w"].shape[0]
    fw2 = jnp.pad(tp["fc2_w"].T, ((0, LANE - d_fc1), (0, LANE - d_fc2))).astype(jnp.bfloat16)
    fb2 = jnp.pad(tp["fc2_b"], (0, LANE - d_fc2)).reshape(1, -1).astype(jnp.float32)
    fw3 = jnp.pad(tp["cls_w"].T, ((0, LANE - d_fc2), (0, LANE - num_classes))).astype(jnp.bfloat16)
    fb3 = jnp.pad(tp["cls_b"], (0, LANE - num_classes)).reshape(1, -1).astype(jnp.float32)
    return dict(conv1_w=w1, bn1_g=g1, bn1_b=b1,
                conv2_w=w2, bn2_g=g2, bn2_b=b2,
                fc1_w=fw1, fc1_b=fb1, fc2_w=fw2, fc2_b=fb2, cls_w=fw3, cls_b=fb3)


# ---------------------------------------------------------------------------
# Forward
# ---------------------------------------------------------------------------
def modified_lenet5_forward(params, x, num_classes=10):
    """x: (B, Cin, 28, 28) NCHW f32. Returns [x2, x3, x4, logits] like the PyTorch module."""
    B = x.shape[0]
    a1 = conv1_block(x, params["conv1_w"], params["bn1_g"], params["bn1_b"])   # (6,B,12,12) bf16
    x2p, x3p, x4p, logp = conv2_mlp_block(a1, params)
    PH2 = (a1.shape[2] - 5 + 1) // 2
    PW2 = (a1.shape[3] - 5 + 1) // 2
    # Materialize the returned NCHW x2 off the critical path of the MLP.
    x2 = jnp.transpose(x2p[:, :C2].reshape(B, PH2, PW2, C2), (0, 3, 1, 2))
    x3 = x3p[:, :FC1_OUT]
    x4 = x4p[:, :FC2_OUT]
    logits = logp[:, :num_classes]
    return [x2, x3, x4, logits]


# ---------------------------------------------------------------------------
# Pure-JAX f32 reference (for correctness sanity check)
# ---------------------------------------------------------------------------
def reference_forward(tp, x):
    hi = lax.Precision.HIGHEST

    def conv(x, w, b):
        y = lax.conv_general_dilated(x, w, (1, 1), "VALID",
                                     dimension_numbers=("NCHW", "OIHW", "NCHW"),
                                     precision=hi)
        return y + b.reshape(1, -1, 1, 1)

    def bn(y, g, b):
        mu = jnp.mean(y, axis=(0, 2, 3), keepdims=True)
        var = jnp.mean((y - mu) ** 2, axis=(0, 2, 3), keepdims=True)
        return (y - mu) * lax.rsqrt(var + BN_EPS) * g.reshape(1, -1, 1, 1) + b.reshape(1, -1, 1, 1)

    def pool(y):
        B, C, H, W = y.shape
        return y.reshape(B, C, H // 2, 2, W // 2, 2).max(axis=(3, 5))

    a1 = pool(jax.nn.relu(bn(conv(x, tp["conv1_w"], tp["conv1_b"]), tp["bn1_g"], tp["bn1_b"])))
    x2 = pool(jax.nn.relu(bn(conv(a1, tp["conv2_w"], tp["conv2_b"]), tp["bn2_g"], tp["bn2_b"])))
    flat = x2.reshape(x.shape[0], -1)
    x3 = jax.nn.relu(jnp.dot(flat, tp["fc1_w"].T, precision=hi) + tp["fc1_b"])
    x4 = jax.nn.relu(jnp.dot(x3, tp["fc2_w"].T, precision=hi) + tp["fc2_b"])
    logits = jnp.dot(x4, tp["cls_w"].T, precision=hi) + tp["cls_b"]
    return [x2, x3, x4, logits]


if __name__ == "__main__":
    key = jax.random.PRNGKey(0)
    k_param, k_x = jax.random.split(key)
    torch_params = init_torch_params(k_param, cin=1, fc1_in=256, num_classes=10)
    params = prepare_params(torch_params, num_classes=10)       # one-time, outside jit

    # 'mnist' config (1, 256, 10): 28x28 single-channel images, batch=2.
    x = jax.random.normal(k_x, (2, 1, 28, 28), jnp.float32)

    fwd = jax.jit(modified_lenet5_forward)
    outputs = fwd(params, x)
    outputs = [jax.block_until_ready(o) for o in outputs]

    expected = [(2, 16, 4, 4), (2, 120), (2, 84), (2, 10)]
    assert [tuple(o.shape) for o in outputs] == expected, \
        f"bad shapes: {[o.shape for o in outputs]}"
    assert all(bool(jnp.all(jnp.isfinite(o))) for o in outputs)

    # Loose-tolerance check vs f32 reference (bf16 MXU operands => ~1% relative diffs;
    # any layout/fold bug would produce O(1) diffs and fail this).
    refs = reference_forward(torch_params, x)
    for name, o, r in zip(("x2", "x3", "x4", "logits"), outputs, refs):
        assert bool(jnp.allclose(o, r, rtol=0.1, atol=0.1)), \
            f"{name} mismatch: max abs diff {float(jnp.max(jnp.abs(o - r)))}"

    print("KERNEL_OK")
</pallas_src>

<mosaic_0001>
module attributes {stable_mosaic.version = 11 : i64} {
  func.func @_conv1_block_kernel(%arg0: memref<25x1536xbf16, #tpu.memory_space<vmem>>, %arg1: memref<6x25xbf16, #tpu.memory_space<vmem>>, %arg2: memref<6x1xf32, #tpu.memory_space<vmem>>, %arg3: memref<6x1xf32, #tpu.memory_space<vmem>>, %arg4: memref<6x384xbf16, #tpu.memory_space<vmem>>) attributes {dimension_semantics = [], scalar_prefetch = 0 : i64, scratch_operands = 0 : i64, tpu.core_type = #tpu.core_type<tc>} {
    %c0 = arith.constant 0 : index
    %c0_0 = arith.constant 0 : index
    %0 = vector.load %arg1[%c0, %c0_0] : memref<6x25xbf16, #tpu.memory_space<vmem>>, vector<6x25xbf16>
    %c0_1 = arith.constant 0 : index
    %c0_2 = arith.constant 0 : index
    %1 = vector.load %arg0[%c0_1, %c0_2] : memref<25x1536xbf16, #tpu.memory_space<vmem>>, vector<25x1536xbf16>
    %cst = arith.constant dense<0.000000e+00> : vector<6x1536xf32>
    %2 = tpu.matmul %0, %1, %cst {dimension_numbers = #tpu.dot_dimension_numbers<[1], [0], [0], [1], [0, 0, 1, 1], [], []>} : vector<6x25xbf16>, vector<25x1536xbf16>, vector<6x1536xf32> -> vector<6x1536xf32>
    %cst_3 = arith.constant dense<0.000000e+00> : vector<6xf32>
    %3 = vector.multi_reduction <add>, %2, %cst_3 [1] : vector<6x1536xf32> to vector<6xf32>
    %4 = vector.shape_cast %3 : vector<6xf32> to vector<6x1xf32>
    %5 = arith.mulf %2, %2 : vector<6x1536xf32>
    %cst_4 = arith.constant dense<0.000000e+00> : vector<6xf32>
    %6 = vector.multi_reduction <add>, %5, %cst_4 [1] : vector<6x1536xf32> to vector<6xf32>
    %7 = vector.shape_cast %6 : vector<6xf32> to vector<6x1xf32>
    %cst_5 = arith.constant 8.68055562E-4 : f32
    %8 = vector.broadcast %cst_5 : f32 to vector<6x1xf32>
    %9 = arith.mulf %4, %8 : vector<6x1xf32>
    %cst_6 = arith.constant 8.68055562E-4 : f32
    %10 = vector.broadcast %cst_6 : f32 to vector<6x1xf32>
    %11 = arith.mulf %7, %10 : vector<6x1xf32>
    %12 = arith.mulf %9, %9 : vector<6x1xf32>
    %13 = arith.subf %11, %12 : vector<6x1xf32>
    %c0_7 = arith.constant 0 : index
    %c0_8 = arith.constant 0 : index
    %14 = vector.load %arg2[%c0_7, %c0_8] : memref<6x1xf32, #tpu.memory_space<vmem>>, vector<6x1xf32>
    %cst_9 = arith.constant 9.99999974E-6 : f32
    %15 = vector.broadcast %cst_9 : f32 to vector<6x1xf32>
    %16 = arith.addf %13, %15 : vector<6x1xf32>
    %17 = math.rsqrt %16 : vector<6x1xf32>
    %18 = arith.mulf %14, %17 : vector<6x1xf32>
    %c0_10 = arith.constant 0 : index
    %c0_11 = arith.constant 0 : index
    %19 = vector.load %arg3[%c0_10, %c0_11] : memref<6x1xf32, #tpu.memory_space<vmem>>, vector<6x1xf32>
    %20 = arith.mulf %9, %18 : vector<6x1xf32>
    %21 = arith.subf %19, %20 : vector<6x1xf32>
    %22 = vector.extract_strided_slice %2 {offsets = [0, 0], sizes = [6, 384], strides = [1, 1]} : vector<6x1536xf32> to vector<6x384xf32>
    %23 = vector.broadcast %18 : vector<6x1xf32> to vector<6x384xf32>
    %24 = arith.mulf %22, %23 : vector<6x384xf32>
    %25 = vector.extract_strided_slice %2 {offsets = [0, 384], sizes = [6, 384], strides = [1, 1]} : vector<6x1536xf32> to vector<6x384xf32>
    %26 = vector.broadcast %18 : vector<6x1xf32> to vector<6x384xf32>
    %27 = arith.mulf %25, %26 : vector<6x384xf32>
    %28 = arith.maximumf %24, %27 : vector<6x384xf32>
    %29 = vector.extract_strided_slice %2 {offsets = [0, 768], sizes = [6, 384], strides = [1, 1]} : vector<6x1536xf32> to vector<6x384xf32>
    %30 = vector.broadcast %18 : vector<6x1xf32> to vector<6x384xf32>
    %31 = arith.mulf %29, %30 : vector<6x384xf32>
    %32 = vector.extract_strided_slice %2 {offsets = [0, 1152], sizes = [6, 384], strides = [1, 1]} : vector<6x1536xf32> to vector<6x384xf32>
    %33 = vector.broadcast %18 : vector<6x1xf32> to vector<6x384xf32>
    %34 = arith.mulf %32, %33 : vector<6x384xf32>
    %35 = arith.maximumf %31, %34 : vector<6x384xf32>
    %36 = arith.maximumf %28, %35 : vector<6x384xf32>
    %37 = vector.broadcast %21 : vector<6x1xf32> to vector<6x384xf32>
    %38 = arith.addf %36, %37 : vector<6x384xf32>
    %cst_12 = arith.constant 0.000000e+00 : f32
    %39 = vector.broadcast %cst_12 : f32 to vector<6x384xf32>
    %40 = arith.maximumf %38, %39 : vector<6x384xf32>
    %41 = arith.truncf %40 : vector<6x384xf32> to vector<6x384xbf16>
    %c0_13 = arith.constant 0 : index
    %c0_14 = arith.constant 0 : index
    %42 = vector.load %arg4[%c0_13, %c0_14] : memref<6x384xbf16, #tpu.memory_space<vmem>>, vector<6x384xbf16>
    tpu.vector_store %arg4[%c0_13, %c0_14], %41 {strides = array<i32>} : memref<6x384xbf16, #tpu.memory_space<vmem>>, vector<6x384xbf16>,
    return
  }
}

module attributes {stable_mosaic.version = 11 : i64} {
  func.func @_conv2_mlp_kernel(%arg0: memref<128x150xbf16, #tpu.memory_space<vmem>>, %arg1: memref<150x128xbf16, #tpu.memory_space<vmem>>, %arg2: memref<1x128xf32, #tpu.memory_space<vmem>>, %arg3: memref<1x128xf32, #tpu.memory_space<vmem>>, %arg4: memref<2048x128xbf16, #tpu.memory_space<vmem>>, %arg5: memref<1x128xf32, #tpu.memory_space<vmem>>, %arg6: memref<128x128xbf16, #tpu.memory_space<vmem>>, %arg7: memref<1x128xf32, #tpu.memory_space<vmem>>, %arg8: memref<128x128xbf16, #tpu.memory_space<vmem>>, %arg9: memref<1x128xf32, #tpu.memory_space<vmem>>, %arg10: memref<32x128xf32, #tpu.memory_space<vmem>>, %arg11: memref<2x128xf32, #tpu.memory_space<vmem>>, %arg12: memref<2x128xf32, #tpu.memory_space<vmem>>, %arg13: memref<2x128xf32, #tpu.memory_space<vmem>>) attributes {dimension_semantics = [], scalar_prefetch = 0 : i64, scratch_operands = 0 : i64, tpu.core_type = #tpu.core_type<tc>} {
    %c0 = arith.constant 0 : index
    %c0_0 = arith.constant 0 : index
    %0 = vector.load %arg0[%c0, %c0_0] : memref<128x150xbf16, #tpu.memory_space<vmem>>, vector<128x150xbf16>
    %c0_1 = arith.constant 0 : index
    %c0_2 = arith.constant 0 : index
    %1 = vector.load %arg1[%c0_1, %c0_2] : memref<150x128xbf16, #tpu.memory_space<vmem>>, vector<150x128xbf16>
    %cst = arith.constant dense<0.000000e+00> : vector<128x128xf32>
    %2 = tpu.matmul %0, %1, %cst {dimension_numbers = #tpu.dot_dimension_numbers<[1], [0], [0], [1], [0, 0, 1, 1], [], []>} : vector<128x150xbf16>, vector<150x128xbf16>, vector<128x128xf32> -> vector<128x128xf32>
    %cst_3 = arith.constant dense<0.000000e+00> : vector<128xf32>
    %3 = vector.multi_reduction <add>, %2, %cst_3 [0] : vector<128x128xf32> to vector<128xf32>
    %4 = vector.shape_cast %3 : vector<128xf32> to vector<1x128xf32>
    %5 = arith.mulf %2, %2 : vector<128x128xf32>
    %cst_4 = arith.constant dense<0.000000e+00> : vector<128xf32>
    %6 = vector.multi_reduction <add>, %5, %cst_4 [0] : vector<128x128xf32> to vector<128xf32>
    %7 = vector.shape_cast %6 : vector<128xf32> to vector<1x128xf32>
    %cst_5 = arith.constant 7.812500e-03 : f32
    %8 = vector.broadcast %cst_5 : f32 to vector<1x128xf32>
    %9 = arith.mulf %4, %8 : vector<1x128xf32>
    %cst_6 = arith.constant 7.812500e-03 : f32
    %10 = vector.broadcast %cst_6 : f32 to vector<1x128xf32>
    %11 = arith.mulf %7, %10 : vector<1x128xf32>
    %12 = arith.mulf %9, %9 : vector<1x128xf32>
    %13 = arith.subf %11, %12 : vector<1x128xf32>
    %c0_7 = arith.constant 0 : index
    %c0_8 = arith.constant 0 : index
    %14 = vector.load %arg2[%c0_7, %c0_8] : memref<1x128xf32, #tpu.memory_space<vmem>>, vector<1x128xf32>
    %cst_9 = arith.constant 9.99999974E-6 : f32
    %15 = vector.broadcast %cst_9 : f32 to vector<1x128xf32>
    %16 = arith.addf %13, %15 : vector<1x128xf32>
    %17 = math.rsqrt %16 : vector<1x128xf32>
    %18 = arith.mulf %14, %17 : vector<1x128xf32>
    %c0_10 = arith.constant 0 : index
    %c0_11 = arith.constant 0 : index
    %19 = vector.load %arg3[%c0_10, %c0_11] : memref<1x128xf32, #tpu.memory_space<vmem>>, vector<1x128xf32>
    %20 = arith.mulf %9, %18 : vector<1x128xf32>
    %21 = arith.subf %19, %20 : vector<1x128xf32>
    %22 = vector.extract_strided_slice %2 {offsets = [0, 0], sizes = [32, 128], strides = [1, 1]} : vector<128x128xf32> to vector<32x128xf32>
    %23 = vector.broadcast %18 : vector<1x128xf32> to vector<32x128xf32>
    %24 = arith.mulf %22, %23 : vector<32x128xf32>
    %25 = vector.extract_strided_slice %2 {offsets = [32, 0], sizes = [32, 128], strides = [1, 1]} : vector<128x128xf32> to vector<32x128xf32>
    %26 = vector.broadcast %18 : vector<1x128xf32> to vector<32x128xf32>
    %27 = arith.mulf %25, %26 : vector<32x128xf32>
    %28 = arith.maximumf %24, %27 : vector<32x128xf32>
    %29 = vector.extract_strided_slice %2 {offsets = [64, 0], sizes = [32, 128], strides = [1, 1]} : vector<128x128xf32> to vector<32x128xf32>
    %30 = vector.broadcast %18 : vector<1x128xf32> to vector<32x128xf32>
    %31 = arith.mulf %29, %30 : vector<32x128xf32>
    %32 = vector.extract_strided_slice %2 {offsets = [96, 0], sizes = [32, 128], strides = [1, 1]} : vector<128x128xf32> to vector<32x128xf32>
    %33 = vector.broadcast %18 : vector<1x128xf32> to vector<32x128xf32>
    %34 = arith.mulf %32, %33 : vector<32x128xf32>
    %35 = arith.maximumf %31, %34 : vector<32x128xf32>
    %36 = arith.maximumf %28, %35 : vector<32x128xf32>
    %37 = vector.broadcast %21 : vector<1x128xf32> to vector<32x128xf32>
    %38 = arith.addf %36, %37 : vector<32x128xf32>
    %cst_12 = arith.constant 0.000000e+00 : f32
    %39 = vector.broadcast %cst_12 : f32 to vector<32x128xf32>
    %40 = arith.maximumf %38, %39 : vector<32x128xf32>
    %c0_13 = arith.constant 0 : index
    %c0_14 = arith.constant 0 : index
    %41 = vector.load %arg10[%c0_13, %c0_14] : memref<32x128xf32, #tpu.memory_space<vmem>>, vector<32x128xf32>
    tpu.vector_store %arg10[%c0_13, %c0_14], %40 {strides = array<i32>} : memref<32x128xf32, #tpu.memory_space<vmem>>, vector<32x128xf32>,
    %42 = vector.shape_cast %40 : vector<32x128xf32> to vector<2x2048xf32>
    %43 = arith.truncf %42 : vector<2x2048xf32> to vector<2x2048xbf16>
    %c0_15 = arith.constant 0 : index
    %c0_16 = arith.constant 0 : index
    %44 = vector.load %arg4[%c0_15, %c0_16] : memref<2048x128xbf16, #tpu.memory_space<vmem>>, vector<2048x128xbf16>
    %cst_17 = arith.constant dense<0.000000e+00> : vector<2x128xf32>
    %45 = tpu.matmul %43, %44, %cst_17 {dimension_numbers = #tpu.dot_dimension_numbers<[1], [0], [0], [1], [0, 0, 1, 1], [], []>} : vector<2x2048xbf16>, vector<2048x128xbf16>, vector<2x128xf32> -> vector<2x128xf32>
    %c0_18 = arith.constant 0 : index
    %c0_19 = arith.constant 0 : index
    %46 = vector.load %arg5[%c0_18, %c0_19] : memref<1x128xf32, #tpu.memory_space<vmem>>, vector<1x128xf32>
    %47 = vector.broadcast %46 : vector<1x128xf32> to vector<2x128xf32>
    %48 = arith.addf %45, %47 : vector<2x128xf32>
    %cst_20 = arith.constant 0.000000e+00 : f32
    %49 = vector.broadcast %cst_20 : f32 to vector<2x128xf32>
    %50 = arith.maximumf %48, %49 : vector<2x128xf32>
    %c0_21 = arith.constant 0 : index
    %c0_22 = arith.constant 0 : index
    %51 = vector.load %arg11[%c0_21, %c0_22] : memref<2x128xf32, #tpu.memory_space<vmem>>, vector<2x128xf32>
    tpu.vector_store %arg11[%c0_21, %c0_22], %50 {strides = array<i32>} : memref<2x128xf32, #tpu.memory_space<vmem>>, vector<2x128xf32>,
    %52 = arith.truncf %50 : vector<2x128xf32> to vector<2x128xbf16>
    %c0_23 = arith.constant 0 : index
    %c0_24 = arith.constant 0 : index
    %53 = vector.load %arg6[%c0_23, %c0_24] : memref<128x128xbf16, #tpu.memory_space<vmem>>, vector<128x128xbf16>
    %cst_25 = arith.constant dense<0.000000e+00> : vector<2x128xf32>
    %54 = tpu.matmul %52, %53, %cst_25 {dimension_numbers = #tpu.dot_dimension_numbers<[1], [0], [0], [1], [0, 0, 1, 1], [], []>} : vector<2x128xbf16>, vector<128x128xbf16>, vector<2x128xf32> -> vector<2x128xf32>
    %c0_26 = arith.constant 0 : index
    %c0_27 = arith.constant 0 : index
    %55 = vector.load %arg7[%c0_26, %c0_27] : memref<1x128xf32, #tpu.memory_space<vmem>>, vector<1x128xf32>
    %56 = vector.broadcast %55 : vector<1x128xf32> to vector<2x128xf32>
    %57 = arith.addf %54, %56 : vector<2x128xf32>
    %cst_28 = arith.constant 0.000000e+00 : f32
    %58 = vector.broadcast %cst_28 : f32 to vector<2x128xf32>
    %59 = arith.maximumf %57, %58 : vector<2x128xf32>
    %c0_29 = arith.constant 0 : index
    %c0_30 = arith.constant 0 : index
    %60 = vector.load %arg12[%c0_29, %c0_30] : memref<2x128xf32, #tpu.memory_space<vmem>>, vector<2x128xf32>
    tpu.vector_store %arg12[%c0_29, %c0_30], %59 {strides = array<i32>} : memref<2x128xf32, #tpu.memory_space<vmem>>, vector<2x128xf32>,
    %61 = arith.truncf %59 : vector<2x128xf32> to vector<2x128xbf16>
    %c0_31 = arith.constant 0 : index
    %c0_32 = arith.constant 0 : index
    %62 = vector.load %arg8[%c0_31, %c0_32] : memref<128x128xbf16, #tpu.memory_space<vmem>>, vector<128x128xbf16>
    %cst_33 = arith.constant dense<0.000000e+00> : vector<2x128xf32>
    %63 = tpu.matmul %61, %62, %cst_33 {dimension_numbers = #tpu.dot_dimension_numbers<[1], [0], [0], [1], [0, 0, 1, 1], [], []>} : vector<2x128xbf16>, vector<128x128xbf16>, vector<2x128xf32> -> vector<2x128xf32>
    %c0_34 = arith.constant 0 : index
    %c0_35 = arith.constant 0 : index
    %64 = vector.load %arg9[%c0_34, %c0_35] : memref<1x128xf32, #tpu.memory_space<vmem>>, vector<1x128xf32>
    %65 = vector.broadcast %64 : vector<1x128xf32> to vector<2x128xf32>
    %66 = arith.addf %63, %65 : vector<2x128xf32>
    %c0_36 = arith.constant 0 : index
    %c0_37 = arith.constant 0 : index
    %67 = vector.load %arg13[%c0_36, %c0_37] : memref<2x128xf32, #tpu.memory_space<vmem>>, vector<2x128xf32>
    tpu.vector_store %arg13[%c0_36, %c0_37], %66 {strides = array<i32>} : memref<2x128xf32, #tpu.memory_space<vmem>>, vector<2x128xf32>,
    return
  }
}

</mosaic_0001>

<llo_original>
// kernel: modified_lenet5_forward.2
$region0: #{modified_lenet5_forward.2}
  #allocation0 [shape = 'u32[]', space=smem, size = 0x4, offset = 0x4, fixed_abs, tag = 'smem constant byte address 0x4 - core index']
  #allocation1 [shape = 'u32[144,128]{1,0:T(1,128)}', space=vmem, size = 0x12000, scoped, tag = 'internal scratch']
  %s0 = inlined_call_operand.vmem [shape: bf16[25,1536], index: 0, kind: input, shape index: {}]
  %s1 = inlined_call_operand.vmem [shape: bf16[6,25], index: 1, kind: input, shape index: {}]
  %s2 = inlined_call_operand.vmem [shape: f32[6,1], index: 2, kind: input, shape index: {}]
  %s3 = inlined_call_operand.vmem [shape: f32[6,1], index: 3, kind: input, shape index: {}]
  %s4 = inlined_call_operand.vmem [shape: bf16[6,384], index: 4, kind: output, shape index: {}]
  %s5 = sld [smem:[#allocation0]]
  $region26: #{modified_lenet5_forward.2} parent=0
    _
  %s7 = ssub.s32 1, %s5
  %s8 = scalar_select 0, %s7, %s5
  // Predicated region
  $region2: #{modified_lenet5_forward.2} parent=0 // pred_check
    _
  $region3: #{modified_lenet5_forward.2} parent=0 // pred_check_branch
    %10 = sbr.rel (0) target = $region5
  $region4: #{modified_lenet5_forward.2} parent=0 // pred_region
    _
  $region5: #{modified_lenet5_forward.2} parent=0 // pred_fallthru
    _
  // Predicated region
  $region6: #{modified_lenet5_forward.2} parent=0 // pred_check
    _
  $region7: #{modified_lenet5_forward.2} parent=0 // pred_check_branch
    %12 = sbr.rel (0) target = $region9
  $region8: #{modified_lenet5_forward.2} parent=0 // pred_region
    _
  $region9: #{modified_lenet5_forward.2} parent=0 // pred_fallthru
    _
  // Predicated region
  $region10: #{modified_lenet5_forward.2} parent=0 // pred_check
    _
  $region11: #{modified_lenet5_forward.2} parent=0 // pred_check_branch
    %14 = sbr.rel (0) target = $region13
  $region12: #{modified_lenet5_forward.2} parent=0 // pred_region
    _
  $region13: #{modified_lenet5_forward.2} parent=0 // pred_fallthru
    _
  // Predicated region
  $region14: #{modified_lenet5_forward.2} parent=0 // pred_check
    _
  $region15: #{modified_lenet5_forward.2} parent=0 // pred_check_branch
    %16 = sbr.rel (0) target = $region17
  $region16: #{modified_lenet5_forward.2} parent=0 // pred_region
    _
  $region17: #{modified_lenet5_forward.2} parent=0 // pred_fallthru
    _
  %v18 = vld [vmem:[%s1] sm:$0x7]
  %v19 = vld [vmem:[%s0] sm:$0xff]
  %v20 = vld [vmem:[%s0 + $0x8] sm:$0xff]
  %v21 = vld [vmem:[%s0 + $0x10] sm:$0xff]
  %v22 = vld [vmem:[%s0 + $0x18] sm:$0xff]
  %v23 = vld [vmem:[%s0 + $0x20] sm:$0xff]
  %v24 = vld [vmem:[%s0 + $0x28] sm:$0xff]
  %v25 = vld [vmem:[%s0 + $0x30] sm:$0xff]
  %v26 = vld [vmem:[%s0 + $0x38] sm:$0xff]
  %v27 = vld [vmem:[%s0 + $0x40] sm:$0xff]
  %v28 = vld [vmem:[%s0 + $0x48] sm:$0xff]
  %v29 = vld [vmem:[%s0 + $0x50] sm:$0xff]
  %v30 = vld [vmem:[%s0 + $0x58] sm:$0xff]
  %v31 = vld [vmem:[%s0 + $0x60] sm:$0xff]
  %v32 = vld [vmem:[%s0 + $0x68] sm:$0xff]
  %v33 = vld [vmem:[%s0 + $0x70] sm:$0xff]
  %v34 = vld [vmem:[%s0 + $0x78] sm:$0xff]
  %v35 = vld [vmem:[%s0 + $0x80] sm:$0xff]
  %v36 = vld [vmem:[%s0 + $0x88] sm:$0xff]
  %v37 = vld [vmem:[%s0 + $0x90] sm:$0x11]
  %v38 = vld [vmem:[%s0 + $0x98] sm:$0x11]
  %v39 = vld [vmem:[%s0 + $0xa0] sm:$0x11]
  %v40 = vld [vmem:[%s0 + $0xa8] sm:$0x11]
  %v41 = vld [vmem:[%s0 + $0xb0] sm:$0x11]
  %v42 = vld [vmem:[%s0 + $0xb8] sm:$0x11]
  %v67 = vunpack.c.l.b16 %v19
  %v68 = vunpack.c.h.b16 %v19
  %v69 = vunpack.c.l.b16 %v20
  %v70 = vunpack.c.h.b16 %v20
  %v71 = vunpack.c.l.b16 %v21
  %v72 = vunpack.c.h.b16 %v21
  %v73 = vunpack.c.l.b16 %v22
  %v74 = vunpack.c.h.b16 %v22
  %v75 = vunpack.c.l.b16 %v23
  %v76 = vunpack.c.h.b16 %v23
  %v77 = vunpack.c.l.b16 %v24
  %v78 = vunpack.c.h.b16 %v24
  %v79 = vunpack.c.l.b16 %v25
  %v80 = vunpack.c.h.b16 %v25
  %v81 = vunpack.c.l.b16 %v26
  %v82 = vunpack.c.h.b16 %v26
  %v83 = vunpack.c.l.b16 %v27
  %v84 = vunpack.c.h.b16 %v27
  %v85 = vunpack.c.l.b16 %v28
  %v86 = vunpack.c.h.b16 %v28
  %v87 = vunpack.c.l.b16 %v29
  %v88 = vunpack.c.h.b16 %v29
  %v89 = vunpack.c.l.b16 %v30
  %v90 = vunpack.c.h.b16 %v30
  %v91 = vunpack.c.l.b16 %v31
  %v92 = vunpack.c.h.b16 %v31
  %v93 = vunpack.c.l.b16 %v32
  %v94 = vunpack.c.h.b16 %v32
  %v95 = vunpack.c.l.b16 %v33
  %v96 = vunpack.c.h.b16 %v33
  %v97 = vunpack.c.l.b16 %v34
  %v98 = vunpack.c.h.b16 %v34
  %v99 = vunpack.c.l.b16 %v35
  %v100 = vunpack.c.h.b16 %v35
  %v101 = vunpack.c.l.b16 %v36
  %v102 = vunpack.c.h.b16 %v36
  %v103 = vunpack.c.l.b16 %v37
  %v104 = vunpack.c.h.b16 %v37
  %v105 = vunpack.c.l.b16 %v38
  %v106 = vunpack.c.h.b16 %v38
  %v107 = vunpack.c.l.b16 %v39
  %v108 = vunpack.c.h.b16 %v39
  %v109 = vunpack.c.l.b16 %v40
  %v110 = vunpack.c.h.b16 %v40
  %v111 = vunpack.c.l.b16 %v41
  %v112 = vunpack.c.h.b16 %v41
  %v113 = vunpack.c.l.b16 %v42
  %v114 = vunpack.c.h.b16 %v42
  %v115 = vpack.c.b16 %v79, %v67
  %v116 = vpack.c.b16 %v80, %v68
  %v117 = vpack.c.b16 %v81, %v69
  %v118 = vpack.c.b16 %v82, %v70
  %v119 = vpack.c.b16 %v83, %v71
  %v120 = vpack.c.b16 %v84, %v72
  %v121 = vpack.c.b16 %v85, %v73
  %v122 = vpack.c.b16 %v86, %v74
  %v123 = vpack.c.b16 %v87, %v75
  %v124 = vpack.c.b16 %v88, %v76
  %v125 = vpack.c.b16 %v89, %v77
  %v126 = vpack.c.b16 %v90, %v78
  %v127 = vpack.c.b16 %v103, %v91
  %v128 = vpack.c.b16 %v104, %v92
  %v129 = vpack.c.b16 %v105, %v93
  %v130 = vpack.c.b16 %v106, %v94
  %v131 = vpack.c.b16 %v107, %v95
  %v132 = vpack.c.b16 %v108, %v96
  %v133 = vpack.c.b16 %v109, %v97
  %v134 = vpack.c.b16 %v110, %v98
  %v135 = vpack.c.b16 %v111, %v99
  %v136 = vpack.c.b16 %v112, %v100
  %v137 = vpack.c.b16 %v113, %v101
  %v138 = vpack.c.b16 %v114, %v102
  %vm151 = vcmask 203776
  %v153 = vsel %vm151, %v18, 0
  %vm155 = vcmask 1043456
  %vm156 = vcmask 1044480
  %v157 = vsel %vm155, 4294967295, 65535
  %v158 = vsel %vm156, %v157, 0
  %v160 = vand.u32 %v127, %v158
  %v163 = vand.u32 %v128, %v158
  %v166 = vand.u32 %v129, %v158
  %v169 = vand.u32 %v130, %v158
  %v172 = vand.u32 %v131, %v158
  %v175 = vand.u32 %v132, %v158
  %v178 = vand.u32 %v133, %v158
  %v181 = vand.u32 %v134, %v158
  %v184 = vand.u32 %v135, %v158
  %v187 = vand.u32 %v136, %v158
  %v190 = vand.u32 %v137, %v158
  %v193 = vand.u32 %v138, %v158
  %195 = vmatprep.subr.bf16.mxu0 %v116
  %196 = vmatpush1.bf16.msra.mxu0 %v115
  %197 = vmatprep.subr.bf16.mxu0 %v163
  %198 = vmatpush1.bf16.msra.mxu0 %v160
  %199 = vmatprep.subr.bf16.mxu0 0
  %200 = vmatpush1.bf16.msra.mxu0 0
  %201 = vmatprep.subr.bf16.mxu0 0
  %202 = vmatpush1.bf16.msra.mxu0 0
  %203 = vmatprep.subr.bf16.mxu0 0
  %204 = vmatpush1.bf16.msra.mxu0 0
  %205 = vmatprep.subr.bf16.mxu0 0
  %206 = vmatpush1.bf16.msra.mxu0 0
  %207 = vmatprep.subr.bf16.mxu0 0
  %208 = vmatpush1.bf16.msra.mxu0 0
  %209 = vmatprep.subr.bf16.mxu0 0
  %210 = vmatpush1.bf16.msra.mxu0 0
  %211 = vmatprep.subr.bf16.mxu0 0
  %212 = vmatpush1.bf16.msra.mxu0 0
  %213 = vmatprep.subr.bf16.mxu0 0
  %214 = vmatpush1.bf16.msra.mxu0 0
  %215 = vmatprep.subr.bf16.mxu0 0
  %216 = vmatpush1.bf16.msra.mxu0 0
  %217 = vmatprep.subr.bf16.mxu0 0
  %218 = vmatpush1.bf16.msra.mxu0 0
  %219 = vmatprep.subr.bf16.mxu0 0
  %220 = vmatpush1.bf16.msra.mxu0 0
  %221 = vmatprep.subr.bf16.mxu0 0
  %222 = vmatpush1.bf16.msra.mxu0 0
  %223 = vmatprep.subr.bf16.mxu0 0
  %224 = vmatpush1.bf16.msra.mxu0 0
  %225 = vmatprep.subr.bf16.mxu0 0
  %226 = vmatpush1.bf16.msra.mxu0 0
  %227 = vmatprep.mubr.bf16.mxu0 0
  %228 = vmatmul.mubr.bf16.gmra.mrb[0].mxu0 %v153
  %v229 = vpop.f32.mrb[0].mxu0
  %v230 = vadd.f32 0.0, %v229
  %v231 = vpop.f32.mrb[0].mxu0
  %v232 = vadd.f32 0.0, %v231
  %v233 = vpop.f32.mrb[0].mxu0
  %v234 = vpop.f32.mrb[0].mxu0
  %235 = vdwg.mxu0
  %236 = vmatprep.subr.bf16.mxu0 %v118
  %237 = vmatpush1.bf16.msra.mxu0 %v117
  %238 = vmatprep.subr.bf16.mxu0 %v169
  %239 = vmatpush1.bf16.msra.mxu0 %v166
  %240 = vmatprep.subr.bf16.mxu0 0
  %241 = vmatpush1.bf16.msra.mxu0 0
  %242 = vmatprep.subr.bf16.mxu0 0
  %243 = vmatpush1.bf16.msra.mxu0 0
  %244 = vmatprep.subr.bf16.mxu0 0
  %245 = vmatpush1.bf16.msra.mxu0 0
  %246 = vmatprep.subr.bf16.mxu0 0
  %247 = vmatpush1.bf16.msra.mxu0 0
  %248 = vmatprep.subr.bf16.mxu0 0
  %249 = vmatpush1.bf16.msra.mxu0 0
  %250 = vmatprep.subr.bf16.mxu0 0
  %251 = vmatpush1.bf16.msra.mxu0 0
  %252 = vmatprep.subr.bf16.mxu0 0
  %253 = vmatpush1.bf16.msra.mxu0 0
  %254 = vmatprep.subr.bf16.mxu0 0
  %255 = vmatpush1.bf16.msra.mxu0 0
  %256 = vmatprep.subr.bf16.mxu0 0
  %257 = vmatpush1.bf16.msra.mxu0 0
  %258 = vmatprep.subr.bf16.mxu0 0
  %259 = vmatpush1.bf16.msra.mxu0 0
  %260 = vmatprep.subr.bf16.mxu0 0
  %261 = vmatpush1.bf16.msra.mxu0 0
  %262 = vmatprep.subr.bf16.mxu0 0
  %263 = vmatpush1.bf16.msra.mxu0 0
  %264 = vmatprep.subr.bf16.mxu0 0
  %265 = vmatpush1.bf16.msra.mxu0 0
  %266 = vmatprep.subr.bf16.mxu0 0
  %267 = vmatpush1.bf16.msra.mxu0 0
  %268 = vmatprep.mubr.bf16.mxu0 0
  %269 = vmatmul.mubr.bf16.gmra.mrb[0].mxu0 %v153
  %v270 = vpop.f32.mrb[0].mxu0
  %v271 = vadd.f32 0.0, %v270
  %v272 = vpop.f32.mrb[0].mxu0
  %v273 = vadd.f32 0.0, %v272
  %v274 = vpop.f32.mrb[0].mxu0
  %v275 = vpop.f32.mrb[0].mxu0
  %276 = vdwg.mxu0
  %277 = vmatprep.subr.bf16.mxu0 %v120
  %278 = vmatpush1.bf16.msra.mxu0 %v119
  %279 = vmatprep.subr.bf16.mxu0 %v175
  %280 = vmatpush1.bf16.msra.mxu0 %v172
  %281 = vmatprep.subr.bf16.mxu0 0
  %282 = vmatpush1.bf16.msra.mxu0 0
  %283 = vmatprep.subr.bf16.mxu0 0
  %284 = vmatpush1.bf16.msra.mxu0 0
  %285 = vmatprep.subr.bf16.mxu0 0
  %286 = vmatpush1.bf16.msra.mxu0 0
  %287 = vmatprep.subr.bf16.mxu0 0
  %288 = vmatpush1.bf16.msra.mxu0 0
  %289 = vmatprep.subr.bf16.mxu0 0
  %290 = vmatpush1.bf16.msra.mxu0 0
  %291 = vmatprep.subr.bf16.mxu0 0
  %292 = vmatpush1.bf16.msra.mxu0 0
  %293 = vmatprep.subr.bf16.mxu0 0
  %294 = vmatpush1.bf16.msra.mxu0 0
  %295 = vmatprep.subr.bf16.mxu0 0
  %296 = vmatpush1.bf16.msra.mxu0 0
  %297 = vmatprep.subr.bf16.mxu0 0
  %298 = vmatpush1.bf16.msra.mxu0 0
  %299 = vmatprep.subr.bf16.mxu0 0
  %300 = vmatpush1.bf16.msra.mxu0 0
  %301 = vmatprep.subr.bf16.mxu0 0
  %302 = vmatpush1.bf16.msra.mxu0 0
  %303 = vmatprep.subr.bf16.mxu0 0
  %304 = vmatpush1.bf16.msra.mxu0 0
  %305 = vmatprep.subr.bf16.mxu0 0
  %306 = vmatpush1.bf16.msra.mxu0 0
  %307 = vmatprep.subr.bf16.mxu0 0
  %308 = vmatpush1.bf16.msra.mxu0 0
  %309 = vmatprep.mubr.bf16.mxu0 0
  %310 = vmatmul.mubr.bf16.gmra.mrb[0].mxu0 %v153
  %v311 = vpop.f32.mrb[0].mxu0
  %v312 = vadd.f32 0.0, %v311
  %v313 = vpop.f32.mrb[0].mxu0
  %v314 = vadd.f32 0.0, %v313
  %v315 = vpop.f32.mrb[0].mxu0
  %v316 = vpop.f32.mrb[0].mxu0
  %317 = vdwg.mxu0
  %318 = vmatprep.subr.bf16.mxu0 %v122
  %319 = vmatpush1.bf16.msra.mxu0 %v121
  %320 = vmatprep.subr.bf16.mxu0 %v181
  %321 = vmatpush1.bf16.msra.mxu0 %v178
  %322 = vmatprep.subr.bf16.mxu0 0
  %323 = vmatpush1.bf16.msra.mxu0 0
  %324 = vmatprep.subr.bf16.mxu0 0
  %325 = vmatpush1.bf16.msra.mxu0 0
  %326 = vmatprep.subr.bf16.mxu0 0
  %327 = vmatpush1.bf16.msra.mxu0 0
  %328 = vmatprep.subr.bf16.mxu0 0
  %329 = vmatpush1.bf16.msra.mxu0 0
  %330 = vmatprep.subr.bf16.mxu0 0
  %331 = vmatpush1.bf16.msra.mxu0 0
  %332 = vmatprep.subr.bf16.mxu0 0
  %333 = vmatpush1.bf16.msra.mxu0 0
  %334 = vmatprep.subr.bf16.mxu0 0
  %335 = vmatpush1.bf16.msra.mxu0 0
  %336 = vmatprep.subr.bf16.mxu0 0
  %337 = vmatpush1.bf16.msra.mxu0 0
  %338 = vmatprep.subr.bf16.mxu0 0
  %339 = vmatpush1.bf16.msra.mxu0 0
  %340 = vmatprep.subr.bf16.mxu0 0
  %341 = vmatpush1.bf16.msra.mxu0 0
  %342 = vmatprep.subr.bf16.mxu0 0
  %343 = vmatpush1.bf16.msra.mxu0 0
  %344 = vmatprep.subr.bf16.mxu0 0
  %345 = vmatpush1.bf16.msra.mxu0 0
  %346 = vmatprep.subr.bf16.mxu0 0
  %347 = vmatpush1.bf16.msra.mxu0 0
  %348 = vmatprep.subr.bf16.mxu0 0
  %349 = vmatpush1.bf16.msra.mxu0 0
  %350 = vmatprep.mubr.bf16.mxu0 0
  %351 = vmatmul.mubr.bf16.gmra.mrb[0].mxu0 %v153
  %v352 = vpop.f32.mrb[0].mxu0
  %v353 = vadd.f32 0.0, %v352
  %v354 = vpop.f32.mrb[0].mxu0
  %v355 = vadd.f32 0.0, %v354
  %v356 = vpop.f32.mrb[0].mxu0
  %v357 = vpop.f32.mrb[0].mxu0
  %358 = vdwg.mxu0
  %359 = vmatprep.subr.bf16.mxu0 %v124
  %360 = vmatpush1.bf16.msra.mxu0 %v123
  %361 = vmatprep.subr.bf16.mxu0 %v187
  %362 = vmatpush1.bf16.msra.mxu0 %v184
  %363 = vmatprep.subr.bf16.mxu0 0
  %364 = vmatpush1.bf16.msra.mxu0 0
  %365 = vmatprep.subr.bf16.mxu0 0
  %366 = vmatpush1.bf16.msra.mxu0 0
  %367 = vmatprep.subr.bf16.mxu0 0
  %368 = vmatpush1.bf16.msra.mxu0 0
  %369 = vmatprep.subr.bf16.mxu0 0
  %370 = vmatpush1.bf16.msra.mxu0 0
  %371 = vmatprep.subr.bf16.mxu0 0
  %372 = vmatpush1.bf16.msra.mxu0 0
  %373 = vmatprep.subr.bf16.mxu0 0
  %374 = vmatpush1.bf16.msra.mxu0 0
  %375 = vmatprep.subr.bf16.mxu0 0
  %376 = vmatpush1.bf16.msra.mxu0 0
  %377 = vmatprep.subr.bf16.mxu0 0
  %378 = vmatpush1.bf16.msra.mxu0 0
  %379 = vmatprep.subr.bf16.mxu0 0
  %380 = vmatpush1.bf16.msra.mxu0 0
  %381 = vmatprep.subr.bf16.mxu0 0
  %382 = vmatpush1.bf16.msra.mxu0 0
  %383 = vmatprep.subr.bf16.mxu0 0
  %384 = vmatpush1.bf16.msra.mxu0 0
  %385 = vmatprep.subr.bf16.mxu0 0
  %386 = vmatpush1.bf16.msra.mxu0 0
  %387 = vmatprep.subr.bf16.mxu0 0
  %388 = vmatpush1.bf16.msra.mxu0 0
  %389 = vmatprep.subr.bf16.mxu0 0
  %390 = vmatpush1.bf16.msra.mxu0 0
  %391 = vmatprep.mubr.bf16.mxu0 0
  %392 = vmatmul.mubr.bf16.gmra.mrb[0].mxu0 %v153
  %v393 = vpop.f32.mrb[0].mxu0
  %v394 = vadd.f32 0.0, %v393
  %v395 = vpop.f32.mrb[0].mxu0
  %v396 = vadd.f32 0.0, %v395
  %v397 = vpop.f32.mrb[0].mxu0
  %v398 = vpop.f32.mrb[0].mxu0
  %399 = vdwg.mxu0
  %400 = vmatprep.subr.bf16.mxu0 %v126
  %401 = vmatpush1.bf16.msra.mxu0 %v125
  %402 = vmatprep.subr.bf16.mxu0 %v193
  %403 = vmatpush1.bf16.msra.mxu0 %v190
  %404 = vmatprep.subr.bf16.mxu0 0
  %405 = vmatpush1.bf16.msra.mxu0 0
  %406 = vmatprep.subr.bf16.mxu0 0
  %407 = vmatpush1.bf16.msra.mxu0 0
  %408 = vmatprep.subr.bf16.mxu0 0
  %409 = vmatpush1.bf16.msra.mxu0 0
  %410 = vmatprep.subr.bf16.mxu0 0
  %411 = vmatpush1.bf16.msra.mxu0 0
  %412 = vmatprep.subr.bf16.mxu0 0
  %413 = vmatpush1.bf16.msra.mxu0 0
  %414 = vmatprep.subr.bf16.mxu0 0
  %415 = vmatpush1.bf16.msra.mxu0 0
  %416 = vmatprep.subr.bf16.mxu0 0
  %417 = vmatpush1.bf16.msra.mxu0 0
  %418 = vmatprep.subr.bf16.mxu0 0
  %419 = vmatpush1.bf16.msra.mxu0 0
  %420 = vmatprep.subr.bf16.mxu0 0
  %421 = vmatpush1.bf16.msra.mxu0 0
  %422 = vmatprep.subr.bf16.mxu0 0
  %423 = vmatpush1.bf16.msra.mxu0 0
  %424 = vmatprep.subr.bf16.mxu0 0
  %425 = vmatpush1.bf16.msra.mxu0 0
  %426 = vmatprep.subr.bf16.mxu0 0
  %427 = vmatpush1.bf16.msra.mxu0 0
  %428 = vmatprep.subr.bf16.mxu0 0
  %429 = vmatpush1.bf16.msra.mxu0 0
  %430 = vmatprep.subr.bf16.mxu0 0
  %431 = vmatpush1.bf16.msra.mxu0 0
  %432 = vmatprep.mubr.bf16.mxu0 0
  %433 = vmatmul.mubr.bf16.gmra.mrb[0].mxu0 %v153
  %v434 = vpop.f32.mrb[0].mxu0
  %v435 = vadd.f32 0.0, %v434
  %v436 = vpop.f32.mrb[0].mxu0
  %v437 = vadd.f32 0.0, %v436
  %v438 = vpop.f32.mrb[0].mxu0
  %v439 = vpop.f32.mrb[0].mxu0
  %440 = vdwg.mxu0
  %vm441 = vcmask 1045504
  %v442 = vsel %vm441, %v230, 0.0
  %v443 = vsel %vm441, %v232, 0.0
  %v444 = vadd.f32 %v442, %v443
  %v445 = vsel %vm441, %v271, 0.0
  %v446 = vadd.f32 %v444, %v445
  %v447 = vsel %vm441, %v273, 0.0
  %v448 = vadd.f32 %v446, %v447
  %v449 = vsel %vm441, %v312, 0.0
  %v450 = vadd.f32 %v448, %v449
  %v451 = vsel %vm441, %v314, 0.0
  %v452 = vadd.f32 %v450, %v451
  %v453 = vsel %vm441, %v353, 0.0
  %v454 = vadd.f32 %v452, %v453
  %v455 = vsel %vm441, %v355, 0.0
  %v456 = vadd.f32 %v454, %v455
  %v457 = vsel %vm441, %v394, 0.0
  %v458 = vadd.f32 %v456, %v457
  %v459 = vsel %vm441, %v396, 0.0
  %v460 = vadd.f32 %v458, %v459
  %v461 = vsel %vm441, %v435, 0.0
  %v462 = vadd.f32 %v460, %v461
  %v463 = vsel %vm441, %v437, 0.0
  %v464 = vadd.f32 %v462, %v463
  %465 = vadd.xlane.f32.xlu0 %v464
  %v466 = vpop.xlane.xlu0 %465
  %v467 = vmul.f32 %v230, %v230
  %v468 = vmul.f32 %v232, %v232
  %v469 = vmul.f32 %v271, %v271
  %v470 = vmul.f32 %v273, %v273
  %v471 = vmul.f32 %v312, %v312
  %v472 = vmul.f32 %v314, %v314
  %v473 = vmul.f32 %v353, %v353
  %v474 = vmul.f32 %v355, %v355
  %v475 = vmul.f32 %v394, %v394
  %v476 = vmul.f32 %v396, %v396
  %v477 = vmul.f32 %v435, %v435
  %v478 = vmul.f32 %v437, %v437
  %v479 = vsel %vm441, %v467, 0.0
  %v480 = vsel %vm441, %v468, 0.0
  %v481 = vadd.f32 %v479, %v480
  %v482 = vsel %vm441, %v469, 0.0
  %v483 = vadd.f32 %v481, %v482
  %v484 = vsel %vm441, %v470, 0.0
  %v485 = vadd.f32 %v483, %v484
  %v486 = vsel %vm441, %v471, 0.0
  %v487 = vadd.f32 %v485, %v486
  %v488 = vsel %vm441, %v472, 0.0
  %v489 = vadd.f32 %v487, %v488
  %v490 = vsel %vm441, %v473, 0.0
  %v491 = vadd.f32 %v489, %v490
  %v492 = vsel %vm441, %v474, 0.0
  %v493 = vadd.f32 %v491, %v492
  %v494 = vsel %vm441, %v475, 0.0
  %v495 = vadd.f32 %v493, %v494
  %v496 = vsel %vm441, %v476, 0.0
  %v497 = vadd.f32 %v495, %v496
  %v498 = vsel %vm441, %v477, 0.0
  %v499 = vadd.f32 %v497, %v498
  %v500 = vsel %vm441, %v478, 0.0
  %v501 = vadd.f32 %v499, %v500
  %502 = vadd.xlane.f32.xlu0 %v501
  %v503 = vpop.xlane.xlu0 %502
  %v504 = vmul.f32 %v466, 0.00086805556
  %v505 = vmul.f32 %v503, 0.00086805556
  %v506 = vmul.f32 %v504, %v504
  %v507 = vsub.f32 %v505, %v506
  %v508 = vld [vmem:[%s2] sm:$0x3f]
  %v509 = vadd.f32 %v507, 1e-05
  %v510 = vrsqrt.pop %v509
  %v511 = vmul.f32 %v508, %v510
  %v512 = vld [vmem:[%s3] sm:$0x3f]
  %v513 = vmul.f32 %v504, %v511
  %v514 = vsub.f32 %v512, %v513
  %516 = vset.pattern.permute.xlu0 0
  %517 = vperm.xlu0 %516, %v511
  %v518 = vpop.permute.xlu0 %517
  %v520 = vmul.f32 %v230, %v518
  %v521 = vmul.f32 %v232, %v518
  %v522 = vmul.f32 %v271, %v518
  %v523 = vmul.f32 %v273, %v518
  %v524 = vmul.f32 %v312, %v518
  %v525 = vmul.f32 %v314, %v518
  %v526 = vmax.f32 %v520, %v523
  %v527 = vmax.f32 %v521, %v524
  %v528 = vmax.f32 %v522, %v525
  %v529 = vmul.f32 %v353, %v518
  %v530 = vmul.f32 %v355, %v518
  %v531 = vmul.f32 %v394, %v518
  %v532 = vmul.f32 %v396, %v518
  %v533 = vmul.f32 %v435, %v518
  %v534 = vmul.f32 %v437, %v518
  %v535 = vmax.f32 %v529, %v532
  %v536 = vmax.f32 %v530, %v533
  %v537 = vmax.f32 %v531, %v534
  %v538 = vmax.f32 %v526, %v535
  %v539 = vmax.f32 %v527, %v536
  %v540 = vmax.f32 %v528, %v537
  %542 = vset.pattern.permute.xlu0 0
  %543 = vperm.xlu0 %542, %v514
  %v544 = vpop.permute.xlu0 %543
  %v546 = vadd.f32 %v538, %v544
  %v547 = vadd.f32 %v539, %v544
  %v548 = vadd.f32 %v540, %v544
  %v549 = vmax.f32 %v546, 0.0
  %v550 = vmax.f32 %v547, 0.0
  %v551 = vmax.f32 %v548, 0.0
  %v552 = vpack.c.bf16 %v549, %v549
  %v553 = vpack.c.bf16 %v550, %v550
  %v554 = vpack.c.bf16 %v551, %v551
  %v558 = vunpack.c.l.b16 %v552
  %v559 = vunpack.c.l.b16 %v553
  %v560 = vunpack.c.l.b16 %v554
  %v561 = vpack.c.b16 %v559, %v558
  %v562 = vpack.c.b16 %v560, %v560
  %565 = vst [vmem:[%s4] sm:$0x77] %v561
  %566 = vst [vmem:[%s4 + $0x8] sm:$0x7] %v562
  // Predicated region
  $region18: #{modified_lenet5_forward.2} parent=0 // pred_check
    _
  $region19: #{modified_lenet5_forward.2} parent=0 // pred_check_branch
    %568 = sbr.rel (0) target = $region21
  $region20: #{modified_lenet5_forward.2} parent=0 // pred_region
    _
  $region21: #{modified_lenet5_forward.2} parent=0 // pred_fallthru
    _
  // Predicated region
  $region22: #{modified_lenet5_forward.2} parent=0 // pred_check
    _
  $region23: #{modified_lenet5_forward.2} parent=0 // pred_check_branch
    %570 = sbr.rel (0) target = $region25
  $region24: #{modified_lenet5_forward.2} parent=0 // pred_region
    _
  $region25: #{modified_lenet5_forward.2} parent=0 // pred_fallthru
    _

// kernel: modified_lenet5_forward.3
$region0: #{modified_lenet5_forward.3}
  #allocation0 [shape = 'u32[]', space=smem, size = 0x4, offset = 0x4, fixed_abs, tag = 'smem constant byte address 0x4 - core index']
  #allocation1 [shape = 'u32[144,128]{1,0:T(1,128)}', space=vmem, size = 0x12000, scoped, tag = 'internal scratch']
  %s0 = inlined_call_operand.vmem [shape: bf16[128,150], index: 0, kind: input, shape index: {}]
  %s1 = inlined_call_operand.vmem [shape: bf16[150,128], index: 1, kind: input, shape index: {}]
  %s2 = inlined_call_operand.vmem [shape: f32[1,128], index: 2, kind: input, shape index: {}]
  %s3 = inlined_call_operand.vmem [shape: f32[1,128], index: 3, kind: input, shape index: {}]
  %s4 = inlined_call_operand.vmem [shape: bf16[2048,128], index: 4, kind: input, shape index: {}]
  %s5 = inlined_call_operand.vmem [shape: f32[1,128], index: 5, kind: input, shape index: {}]
  %s6 = inlined_call_operand.vmem [shape: bf16[128,128], index: 6, kind: input, shape index: {}]
  %s7 = inlined_call_operand.vmem [shape: f32[1,128], index: 7, kind: input, shape index: {}]
  %s8 = inlined_call_operand.vmem [shape: bf16[128,128], index: 8, kind: input, shape index: {}]
  %s9 = inlined_call_operand.vmem [shape: f32[1,128], index: 9, kind: input, shape index: {}]
  %s10 = inlined_call_operand.hbm [shape: f32[32,128], index: 10, kind: output, shape index: {0}]
  %s11 = inlined_call_operand.hbm [shape: f32[2,128], index: 11, kind: output, shape index: {1}]
  %s12 = inlined_call_operand.hbm [shape: f32[2,128], index: 12, kind: output, shape index: {2}]
  %s13 = inlined_call_operand.hbm [shape: f32[2,128], index: 13, kind: output, shape index: {3}]
  %14 = xla_tuple %s10, %s11, %s12, %s13
  %s15 = sld [smem:[#allocation0]]
  $region74: #{modified_lenet5_forward.3} parent=0
    _
  %s17 = ssub.s32 1, %s15
  %s18 = scalar_select 0, %s17, %s15
  $region1: #{modified_lenet5_forward.3} parent=0
    #allocation2 [shape = 'u8[16384]{0}', space=vmem, size = 0x4000, scoped, tag = 'output window, operand 0, single buffered']
    #allocation3 [shape = 's32[1]{0}', space=sflag, size = 0x4, scoped, tag = 'scoped memory for modified_lenet5_forward.3']
    #allocation4 [shape = 'u8[1024]{0}', space=vmem, size = 0x400, scoped, tag = 'output window, operand 1, single buffered']
    #allocation5 [shape = 's32[1]{0}', space=sflag, size = 0x4, scoped, tag = 'scoped memory for modified_lenet5_forward.3']
    #allocation6 [shape = 'u8[1024]{0}', space=vmem, size = 0x400, scoped, tag = 'output window, operand 2, single buffered']
    #allocation7 [shape = 'u8[1024]{0}', space=vmem, size = 0x400, scoped, tag = 'output window, operand 3, single buffered']
    #allocation8 [shape = 's32[1]{0}', space=sflag, size = 0x4, scoped, tag = 'scoped memory for modified_lenet5_forward.3']
    %19 = vsyncpa [#allocation3], 0
    %20 = vsyncpa [#allocation5], 0
    %21 = vsyncpa [#allocation8], 0
    // Predicated region
    $region2: #{modified_lenet5_forward.3} parent=1 // pred_check
      _
    $region3: #{modified_lenet5_forward.3} parent=1 // pred_check_branch
      %23 = sbr.rel (0) target = $region5
    $region4: #{modified_lenet5_forward.3} parent=1 // pred_region
      _
    $region5: #{modified_lenet5_forward.3} parent=1 // pred_fallthru
      _
    // Predicated region
    $region6: #{modified_lenet5_forward.3} parent=1 // pred_check
      _
    $region7: #{modified_lenet5_forward.3} parent=1 // pred_check_branch
      %25 = sbr.rel (0) target = $region9
    $region8: #{modified_lenet5_forward.3} parent=1 // pred_region
      _
    $region9: #{modified_lenet5_forward.3} parent=1 // pred_fallthru
      _
    // Predicated region
    $region10: #{modified_lenet5_forward.3} parent=1 // pred_check
      _
    $region11: #{modified_lenet5_forward.3} parent=1 // pred_check_branch
      %27 = sbr.rel (0) target = $region13
    $region12: #{modified_lenet5_forward.3} parent=1 // pred_region
      _
    $region13: #{modified_lenet5_forward.3} parent=1 // pred_fallthru
      _
    // Predicated region
    $region14: #{modified_lenet5_forward.3} parent=1 // pred_check
      _
    $region15: #{modified_lenet5_forward.3} parent=1 // pred_check_branch
      %29 = sbr.rel (0) target = $region17
    $region16: #{modified_lenet5_forward.3} parent=1 // pred_region
      _
    $region17: #{modified_lenet5_forward.3} parent=1 // pred_fallthru
      _
    // Predicated region
    $region18: #{modified_lenet5_forward.3} parent=1 // pred_check
      _
    $region19: #{modified_lenet5_forward.3} parent=1 // pred_check_branch
      %31 = sbr.rel (0) target = $region21
    $region20: #{modified_lenet5_forward.3} parent=1 // pred_region
      _
    $region21: #{modified_lenet5_forward.3} parent=1 // pred_fallthru
      _
    // Predicated region
    $region22: #{modified_lenet5_forward.3} parent=1 // pred_check
      _
    $region23: #{modified_lenet5_forward.3} parent=1 // pred_check_branch
      %33 = sbr.rel (0) target = $region25
    $region24: #{modified_lenet5_forward.3} parent=1 // pred_region
      _
    $region25: #{modified_lenet5_forward.3} parent=1 // pred_fallthru
      _
    // Predicated region
    $region26: #{modified_lenet5_forward.3} parent=1 // pred_check
      _
    $region27: #{modified_lenet5_forward.3} parent=1 // pred_check_branch
      %35 = sbr.rel (0) target = $region29
    $region28: #{modified_lenet5_forward.3} parent=1 // pred_region
      _
    $region29: #{modified_lenet5_forward.3} parent=1 // pred_fallthru
      _
    // Predicated region
    $region30: #{modified_lenet5_forward.3} parent=1 // pred_check
      _
    $region31: #{modified_lenet5_forward.3} parent=1 // pred_check_branch
      %37 = sbr.rel (0) target = $region33
    $region32: #{modified_lenet5_forward.3} parent=1 // pred_region
      _
    $region33: #{modified_lenet5_forward.3} parent=1 // pred_fallthru
      _
    // Predicated region
    $region34: #{modified_lenet5_forward.3} parent=1 // pred_check
      _
    $region35: #{modified_lenet5_forward.3} parent=1 // pred_check_branch
      %39 = sbr.rel (0) target = $region37
    $region36: #{modified_lenet5_forward.3} parent=1 // pred_region
      _
    $region37: #{modified_lenet5_forward.3} parent=1 // pred_fallthru
      _
    // Predicated region
    $region38: #{modified_lenet5_forward.3} parent=1 // pred_check
      _
    $region39: #{modified_lenet5_forward.3} parent=1 // pred_check_branch
      %41 = sbr.rel (0) target = $region41
    $region40: #{modified_lenet5_forward.3} parent=1 // pred_region
      _
    $region41: #{modified_lenet5_forward.3} parent=1 // pred_fallthru
      _
    %v43 = vld [vmem:[%s0] sm:$0xff]
    %v44 = vld [vmem:[%s0 + $0x8] sm:$0xff]
    %v45 = vld [vmem:[%s0 + $0x10] sm:$0xff]
    %v46 = vld [vmem:[%s0 + $0x18] sm:$0xff]
    %v47 = vld [vmem:[%s0 + $0x20] sm:$0xff]
    %v48 = vld [vmem:[%s0 + $0x28] sm:$0xff]
    %v49 = vld [vmem:[%s0 + $0x30] sm:$0xff]
    %v50 = vld [vmem:[%s0 + $0x38] sm:$0xff]
    %v51 = vld [vmem:[%s0 + $0x40] sm:$0xff]
    %v52 = vld [vmem:[%s0 + $0x48] sm:$0xff]
    %v53 = vld [vmem:[%s0 + $0x50] sm:$0xff]
    %v54 = vld [vmem:[%s0 + $0x58] sm:$0xff]
    %v55 = vld [vmem:[%s0 + $0x60] sm:$0xff]
    %v56 = vld [vmem:[%s0 + $0x68] sm:$0xff]
    %v57 = vld [vmem:[%s0 + $0x70] sm:$0xff]
    %v58 = vld [vmem:[%s0 + $0x78] sm:$0xff]
    %v59 = vld [vmem:[%s1] sm:$0xf]
    %v60 = vld [vmem:[%s1 + $0x4] sm:$0xf]
    %v61 = vld [vmem:[%s1 + $0x8] sm:$0xf]
    %v62 = vld [vmem:[%s1 + $0xc] sm:$0xf]
    %v63 = vld [vmem:[%s1 + $0x10] sm:$0xf]
    %v64 = vld [vmem:[%s1 + $0x14] sm:$0xf]
    %v65 = vld [vmem:[%s1 + $0x18] sm:$0xf]
    %v66 = vld [vmem:[%s1 + $0x1c] sm:$0xf]
    %v67 = vld [vmem:[%s1 + $0x20] sm:$0xf]
    %v68 = vld [vmem:[%s1 + $0x24] sm:$0xf]
    %v69 = vld [vmem:[%s1 + $0x28] sm:$0xf]
    %v70 = vld [vmem:[%s1 + $0x2c] sm:$0xf]
    %v71 = vld [vmem:[%s1 + $0x30] sm:$0xf]
    %v72 = vld [vmem:[%s1 + $0x34] sm:$0xf]
    %v73 = vld [vmem:[%s1 + $0x38] sm:$0xf]
    %v74 = vld [vmem:[%s1 + $0x3c] sm:$0xf]
    %v75 = vld [vmem:[%s1 + $0x40] sm:$0xf]
    %v76 = vld [vmem:[%s1 + $0x44] sm:$0xf]
    %v77 = vld [vmem:[%s1 + $0x48] sm:$0x7]
    %v94 = vunpack.c.l.b16 %v43
    %v95 = vunpack.c.h.b16 %v43
    %v96 = vunpack.c.l.b16 %v44
    %v97 = vunpack.c.h.b16 %v44
    %v98 = vunpack.c.l.b16 %v45
    %v99 = vunpack.c.h.b16 %v45
    %v100 = vunpack.c.l.b16 %v46
    %v101 = vunpack.c.h.b16 %v46
    %v102 = vunpack.c.l.b16 %v47
    %v103 = vunpack.c.h.b16 %v47
    %v104 = vunpack.c.l.b16 %v48
    %v105 = vunpack.c.h.b16 %v48
    %v106 = vunpack.c.l.b16 %v49
    %v107 = vunpack.c.h.b16 %v49
    %v108 = vunpack.c.l.b16 %v50
    %v109 = vunpack.c.h.b16 %v50
    %v110 = vunpack.c.l.b16 %v51
    %v111 = vunpack.c.h.b16 %v51
    %v112 = vunpack.c.l.b16 %v52
    %v113 = vunpack.c.h.b16 %v52
    %v114 = vunpack.c.l.b16 %v53
    %v115 = vunpack.c.h.b16 %v53
    %v116 = vunpack.c.l.b16 %v54
    %v117 = vunpack.c.h.b16 %v54
    %v118 = vunpack.c.l.b16 %v55
    %v119 = vunpack.c.h.b16 %v55
    %v120 = vunpack.c.l.b16 %v56
    %v121 = vunpack.c.h.b16 %v56
    %v122 = vunpack.c.l.b16 %v57
    %v123 = vunpack.c.h.b16 %v57
    %v124 = vunpack.c.l.b16 %v58
    %v125 = vunpack.c.h.b16 %v58
    %v126 = vpack.c.b16 %v96, %v94
    %v127 = vpack.c.b16 %v97, %v95
    %v128 = vpack.c.b16 %v100, %v98
    %v129 = vpack.c.b16 %v101, %v99
    %v130 = vpack.c.b16 %v104, %v102
    %v131 = vpack.c.b16 %v105, %v103
    %v132 = vpack.c.b16 %v108, %v106
    %v133 = vpack.c.b16 %v109, %v107
    %v134 = vpack.c.b16 %v112, %v110
    %v135 = vpack.c.b16 %v113, %v111
    %v136 = vpack.c.b16 %v116, %v114
    %v137 = vpack.c.b16 %v117, %v115
    %v138 = vpack.c.b16 %v120, %v118
    %v139 = vpack.c.b16 %v121, %v119
    %v140 = vpack.c.b16 %v124, %v122
    %v141 = vpack.c.b16 %v125, %v123
    %v169 = vunpack.c.l.b16 %v59
    %v170 = vunpack.c.l.b16 %v60
    %v171 = vunpack.c.l.b16 %v61
    %v172 = vunpack.c.l.b16 %v62
    %v173 = vunpack.c.l.b16 %v63
    %v174 = vunpack.c.l.b16 %v64
    %v175 = vunpack.c.l.b16 %v65
    %v176 = vunpack.c.l.b16 %v66
    %v177 = vunpack.c.l.b16 %v67
    %v178 = vunpack.c.l.b16 %v68
    %v179 = vunpack.c.l.b16 %v69
    %v180 = vunpack.c.l.b16 %v70
    %v181 = vunpack.c.l.b16 %v71
    %v182 = vunpack.c.l.b16 %v72
    %v183 = vunpack.c.l.b16 %v73
    %v184 = vunpack.c.l.b16 %v74
    %v185 = vunpack.c.l.b16 %v75
    %v186 = vunpack.c.l.b16 %v76
    %v187 = vunpack.c.l.b16 %v77
    %v188 = vpack.c.b16 %v170, %v169
    %v189 = vpack.c.b16 %v172, %v171
    %v190 = vpack.c.b16 %v174, %v173
    %v191 = vpack.c.b16 %v176, %v175
    %v192 = vpack.c.b16 %v178, %v177
    %v193 = vpack.c.b16 %v180, %v179
    %v194 = vpack.c.b16 %v182, %v181
    %v195 = vpack.c.b16 %v184, %v183
    %v196 = vpack.c.b16 %v186, %v185
    %v197 = vpack.c.b16 %v187, %v187
    %vm207 = vcmask 179200
    %v209 = vsel %vm207, %v127, 0
    %v212 = vsel %vm207, %v129, 0
    %v215 = vsel %vm207, %v131, 0
    %v218 = vsel %vm207, %v133, 0
    %v221 = vsel %vm207, %v135, 0
    %v224 = vsel %vm207, %v137, 0
    %v227 = vsel %vm207, %v139, 0
    %v230 = vsel %vm207, %v141, 0
    %vm232 = vcmask 1042432
    %v234 = vsel %vm232, %v197, 0
    %236 = vmatprep.subr.bf16.mxu0 0
    %237 = vmatpush1.bf16.msra.mxu0 %v188
    %238 = vmatprep.subr.bf16.mxu0 0
    %239 = vmatpush1.bf16.msra.mxu0 %v189
    %240 = vmatprep.subr.bf16.mxu0 0
    %241 = vmatpush1.bf16.msra.mxu0 %v190
    %242 = vmatprep.subr.bf16.mxu0 0
    %243 = vmatpush1.bf16.msra.mxu0 %v191
    %244 = vmatprep.subr.bf16.mxu0 0
    %245 = vmatpush1.bf16.msra.mxu0 %v192
    %246 = vmatprep.subr.bf16.mxu0 0
    %247 = vmatpush1.bf16.msra.mxu0 %v193
    %248 = vmatprep.subr.bf16.mxu0 0
    %249 = vmatpush1.bf16.msra.mxu0 %v194
    %250 = vmatprep.subr.bf16.mxu0 0
    %251 = vmatpush1.bf16.msra.mxu0 %v195
    %252 = vmatprep.subr.bf16.mxu0 0
    %253 = vmatpush1.bf16.msra.mxu0 %v196
    %254 = vmatprep.subr.bf16.mxu0 0
    %255 = vmatpush1.bf16.msra.mxu0 %v234
    %256 = vmatprep.subr.bf16.mxu0 0
    %257 = vmatpush1.bf16.msra.mxu0 0
    %258 = vmatprep.subr.bf16.mxu0 0
    %259 = vmatpush1.bf16.msra.mxu0 0
    %260 = vmatprep.subr.bf16.mxu0 0
    %261 = vmatpush1.bf16.msra.mxu0 0
    %262 = vmatprep.subr.bf16.mxu0 0
    %263 = vmatpush1.bf16.msra.mxu0 0
    %264 = vmatprep.subr.bf16.mxu0 0
    %265 = vmatpush1.bf16.msra.mxu0 0
    %266 = vmatprep.subr.bf16.mxu0 0
    %267 = vmatpush1.bf16.msra.mxu0 0
    %268 = vmatprep.mubr.bf16.mxu0 %v209
    %269 = vmatmul.mubr.bf16.gmra.mrb[0].mxu0 %v126
    %v270 = vpop.f32.mrb[0].mxu0
    %v271 = vadd.f32 0.0, %v270
    %v272 = vpop.f32.mrb[0].mxu0
    %v273 = vpop.f32.mrb[0].mxu0
    %v274 = vadd.f32 0.0, %v273
    %v275 = vpop.f32.mrb[0].mxu0
    %276 = vmatprep.mubr.bf16.mxu0 %v212
    %277 = vmatmul.mubr.bf16.gmra.mrb[0].mxu0 %v128
    %v278 = vpop.f32.mrb[0].mxu0
    %v279 = vadd.f32 0.0, %v278
    %v280 = vpop.f32.mrb[0].mxu0
    %v281 = vpop.f32.mrb[0].mxu0
    %v282 = vadd.f32 0.0, %v281
    %v283 = vpop.f32.mrb[0].mxu0
    %284 = vmatprep.mubr.bf16.mxu0 %v215
    %285 = vmatmul.mubr.bf16.gmra.mrb[0].mxu0 %v130
    %v286 = vpop.f32.mrb[0].mxu0
    %v287 = vadd.f32 0.0, %v286
    %v288 = vpop.f32.mrb[0].mxu0
    %v289 = vpop.f32.mrb[0].mxu0
    %v290 = vadd.f32 0.0, %v289
    %v291 = vpop.f32.mrb[0].mxu0
    %292 = vmatprep.mubr.bf16.mxu0 %v218
    %293 = vmatmul.mubr.bf16.gmra.mrb[0].mxu0 %v132
    %v294 = vpop.f32.mrb[0].mxu0
    %v295 = vadd.f32 0.0, %v294
    %v296 = vpop.f32.mrb[0].mxu0
    %v297 = vpop.f32.mrb[0].mxu0
    %v298 = vadd.f32 0.0, %v297
    %v299 = vpop.f32.mrb[0].mxu0
    %300 = vmatprep.mubr.bf16.mxu0 %v221
    %301 = vmatmul.mubr.bf16.gmra.mrb[0].mxu0 %v134
    %v302 = vpop.f32.mrb[0].mxu0
    %v303 = vadd.f32 0.0, %v302
    %v304 = vpop.f32.mrb[0].mxu0
    %v305 = vpop.f32.mrb[0].mxu0
    %v306 = vadd.f32 0.0, %v305
    %v307 = vpop.f32.mrb[0].mxu0
    %308 = vmatprep.mubr.bf16.mxu0 %v224
    %309 = vmatmul.mubr.bf16.gmra.mrb[0].mxu0 %v136
    %v310 = vpop.f32.mrb[0].mxu0
    %v311 = vadd.f32 0.0, %v310
    %v312 = vpop.f32.mrb[0].mxu0
    %v313 = vpop.f32.mrb[0].mxu0
    %v314 = vadd.f32 0.0, %v313
    %v315 = vpop.f32.mrb[0].mxu0
    %316 = vmatprep.mubr.bf16.mxu0 %v227
    %317 = vmatmul.mubr.bf16.gmra.mrb[0].mxu0 %v138
    %v318 = vpop.f32.mrb[0].mxu0
    %v319 = vadd.f32 0.0, %v318
    %v320 = vpop.f32.mrb[0].mxu0
    %v321 = vpop.f32.mrb[0].mxu0
    %v322 = vadd.f32 0.0, %v321
    %v323 = vpop.f32.mrb[0].mxu0
    %324 = vmatprep.mubr.bf16.mxu0 %v230
    %325 = vmatmul.mubr.bf16.gmra.mrb[0].mxu0 %v140
    %v326 = vpop.f32.mrb[0].mxu0
    %v327 = vadd.f32 0.0, %v326
    %v328 = vpop.f32.mrb[0].mxu0
    %v329 = vpop.f32.mrb[0].mxu0
    %v330 = vadd.f32 0.0, %v329
    %v331 = vpop.f32.mrb[0].mxu0
    %332 = vdwg.mxu0
    %v333 = vadd.f32 %v271, %v274
    %v334 = vadd.f32 %v333, %v279
    %v335 = vadd.f32 %v334, %v282
    %v336 = vadd.f32 %v335, %v287
    %v337 = vadd.f32 %v336, %v290
    %v338 = vadd.f32 %v337, %v295
    %v339 = vadd.f32 %v338, %v298
    %v340 = vadd.f32 %v339, %v303
    %v341 = vadd.f32 %v340, %v306
    %v342 = vadd.f32 %v341, %v311
    %v343 = vadd.f32 %v342, %v314
    %v344 = vadd.f32 %v343, %v319
    %v345 = vadd.f32 %v344, %v322
    %v346 = vadd.f32 %v345, %v327
    %v347 = vadd.f32 %v346, %v330
    %v348 = vrot.slane %v347, 4
    %v349 = vadd.f32 %v347, %v348
    %v350 = vrot.slane %v349, 2
    %v351 = vadd.f32 %v349, %v350
    %v352 = vrot.slane %v351, 1
    %v353 = vadd.f32 %v351, %v352
    %v354 = vmul.f32 %v271, %v271
    %v355 = vmul.f32 %v274, %v274
    %v356 = vmul.f32 %v279, %v279
    %v357 = vmul.f32 %v282, %v282
    %v358 = vmul.f32 %v287, %v287
    %v359 = vmul.f32 %v290, %v290
    %v360 = vmul.f32 %v295, %v295
    %v361 = vmul.f32 %v298, %v298
    %v362 = vmul.f32 %v303, %v303
    %v363 = vmul.f32 %v306, %v306
    %v364 = vmul.f32 %v311, %v311
    %v365 = vmul.f32 %v314, %v314
    %v366 = vmul.f32 %v319, %v319
    %v367 = vmul.f32 %v322, %v322
    %v368 = vmul.f32 %v327, %v327
    %v369 = vmul.f32 %v330, %v330
    %v370 = vadd.f32 %v354, %v355
    %v371 = vadd.f32 %v370, %v356
    %v372 = vadd.f32 %v371, %v357
    %v373 = vadd.f32 %v372, %v358
    %v374 = vadd.f32 %v373, %v359
    %v375 = vadd.f32 %v374, %v360
    %v376 = vadd.f32 %v375, %v361
    %v377 = vadd.f32 %v376, %v362
    %v378 = vadd.f32 %v377, %v363
    %v379 = vadd.f32 %v378, %v364
    %v380 = vadd.f32 %v379, %v365
    %v381 = vadd.f32 %v380, %v366
    %v382 = vadd.f32 %v381, %v367
    %v383 = vadd.f32 %v382, %v368
    %v384 = vadd.f32 %v383, %v369
    %v385 = vrot.slane %v384, 4
    %v386 = vadd.f32 %v384, %v385
    %v387 = vrot.slane %v386, 2
    %v388 = vadd.f32 %v386, %v387
    %v389 = vrot.slane %v388, 1
    %v390 = vadd.f32 %v388, %v389
    %v391 = vmul.f32 %v353, 0.0078125
    %v392 = vmul.f32 %v390, 0.0078125
    %v393 = vmul.f32 %v391, %v391
    %v394 = vsub.f32 %v392, %v393
    %v395 = vld [vmem:[%s2] sm:$0x1]
    %v396 = vadd.f32 %v394, 1e-05
    %v397 = vrsqrt.pop %v396
    %v398 = vmul.f32 %v395, %v397
    %v399 = vld [vmem:[%s3] sm:$0x1]
    %v400 = vmul.f32 %v391, %v398
    %v401 = vsub.f32 %v399, %v400
    %v403 = vlaneseq
    %v404 = vshrl.u32 %v403, 7
    %v405 = vsub.s32 0, %v404
    %v406 = vrot.slane %v398, %v405
    %v408 = vmul.f32 %v271, %v406
    %v409 = vmul.f32 %v274, %v406
    %v410 = vmul.f32 %v279, %v406
    %v411 = vmul.f32 %v282, %v406
    %v412 = vmul.f32 %v287, %v406
    %v413 = vmul.f32 %v290, %v406
    %v414 = vmul.f32 %v295, %v406
    %v415 = vmul.f32 %v298, %v406
    %v416 = vmax.f32 %v408, %v412
    %v417 = vmax.f32 %v409, %v413
    %v418 = vmax.f32 %v410, %v414
    %v419 = vmax.f32 %v411, %v415
    %v420 = vmul.f32 %v303, %v406
    %v421 = vmul.f32 %v306, %v406
    %v422 = vmul.f32 %v311, %v406
    %v423 = vmul.f32 %v314, %v406
    %v424 = vmul.f32 %v319, %v406
    %v425 = vmul.f32 %v322, %v406
    %v426 = vmul.f32 %v327, %v406
    %v427 = vmul.f32 %v330, %v406
    %v428 = vmax.f32 %v420, %v424
    %v429 = vmax.f32 %v421, %v425
    %v430 = vmax.f32 %v422, %v426
    %v431 = vmax.f32 %v423, %v427
    %v432 = vmax.f32 %v416, %v428
    %v433 = vmax.f32 %v417, %v429
    %v434 = vmax.f32 %v418, %v430
    %v435 = vmax.f32 %v419, %v431
    %v437 = vlaneseq
    %v438 = vshrl.u32 %v437, 7
    %v439 = vsub.s32 0, %v438
    %v440 = vrot.slane %v401, %v439
    %v442 = vadd.f32 %v432, %v440
    %v443 = vadd.f32 %v433, %v440
    %v444 = vadd.f32 %v434, %v440
    %v445 = vadd.f32 %v435, %v440
    %v446 = vmax.f32 %v442, 0.0
    %v447 = vmax.f32 %v443, 0.0
    %v448 = vmax.f32 %v444, 0.0
    %v449 = vmax.f32 %v445, 0.0
    %450 = vst [vmem:[#allocation2] sm:$0xff] %v446
    %451 = vst [vmem:[#allocation2 + $0x8] sm:$0xff] %v447
    %452 = vst [vmem:[#allocation2 + $0x10] sm:$0xff] %v448
    %453 = vst [vmem:[#allocation2 + $0x18] sm:$0xff] %v449
    %v458 = vcombine.low %v446, %v448
    %v459 = vcombine.high %v446, %v448
    %v461 = vunpack.c.l.s4 1966171168
    %v462 = vunpack.c.0.s8 %v461
    %v463 = vlaneseq
    %v464 = vshrl.u32 %v463, 7
    %v465 = vsub.s32 %v462, %v464
    %v466 = vrot.slane %v458, %v465
    %v468 = vunpack.c.l.s4 1966171168
    %v469 = vunpack.c.0.s8 %v468
    %v470 = vlaneseq
    %v471 = vshrl.u32 %v470, 7
    %v472 = vsub.s32 %v469, %v471
    %v473 = vrot.slane %v459, %v472
    %v474 = vcombine.high %v466, %v466
    %v475 = vcombine.high %v473, %v473
    %v477 = vunpack.c.l.s4 1966171168
    %v478 = vunpack.c.0.s8 %v477
    %v479 = vlaneseq
    %v480 = vshrl.u32 %v479, 7
    %v481 = vsub.s32 %v478, %v480
    %v482 = vrot.slane %v466, %v481
    %v484 = vunpack.c.l.s4 1966171168
    %v485 = vunpack.c.0.s8 %v484
    %v486 = vlaneseq
    %v487 = vshrl.u32 %v486, 7
    %v488 = vsub.s32 %v485, %v487
    %v489 = vrot.slane %v473, %v488
    %v491 = vunpack.c.l.s4 1966171168
    %v492 = vunpack.c.0.s8 %v491
    %v493 = vlaneseq
    %v494 = vshrl.u32 %v493, 7
    %v495 = vsub.s32 %v492, %v494
    %v496 = vrot.slane %v474, %v495
    %v498 = vunpack.c.l.s4 1966171168
    %v499 = vunpack.c.0.s8 %v498
    %v500 = vlaneseq
    %v501 = vshrl.u32 %v500, 7
    %v502 = vsub.s32 %v499, %v501
    %v503 = vrot.slane %v475, %v502
    %v504 = vcombine.high %v482, %v482
    %v505 = vcombine.high %v489, %v489
    %v506 = vcombine.high %v496, %v496
    %v507 = vcombine.high %v503, %v503
    %v508 = vcombine.low %v447, %v449
    %v509 = vcombine.high %v447, %v449
    %v511 = vunpack.c.l.s4 1966171168
    %v512 = vunpack.c.0.s8 %v511
    %v513 = vlaneseq
    %v514 = vshrl.u32 %v513, 7
    %v515 = vsub.s32 %v512, %v514
    %v516 = vrot.slane %v508, %v515
    %v518 = vunpack.c.l.s4 1966171168
    %v519 = vunpack.c.0.s8 %v518
    %v520 = vlaneseq
    %v521 = vshrl.u32 %v520, 7
    %v522 = vsub.s32 %v519, %v521
    %v523 = vrot.slane %v509, %v522
    %v524 = vcombine.high %v516, %v516
    %v525 = vcombine.high %v523, %v523
    %v527 = vunpack.c.l.s4 1966171168
    %v528 = vunpack.c.0.s8 %v527
    %v529 = vlaneseq
    %v530 = vshrl.u32 %v529, 7
    %v531 = vsub.s32 %v528, %v530
    %v532 = vrot.slane %v516, %v531
    %v534 = vunpack.c.l.s4 1966171168
    %v535 = vunpack.c.0.s8 %v534
    %v536 = vlaneseq
    %v537 = vshrl.u32 %v536, 7
    %v538 = vsub.s32 %v535, %v537
    %v539 = vrot.slane %v523, %v538
    %v541 = vunpack.c.l.s4 1966171168
    %v542 = vunpack.c.0.s8 %v541
    %v543 = vlaneseq
    %v544 = vshrl.u32 %v543, 7
    %v545 = vsub.s32 %v542, %v544
    %v546 = vrot.slane %v524, %v545
    %v548 = vunpack.c.l.s4 1966171168
    %v549 = vunpack.c.0.s8 %v548
    %v550 = vlaneseq
    %v551 = vshrl.u32 %v550, 7
    %v552 = vsub.s32 %v549, %v551
    %v553 = vrot.slane %v525, %v552
    %v554 = vcombine.high %v532, %v532
    %v555 = vcombine.high %v539, %v539
    %v556 = vcombine.high %v546, %v546
    %v557 = vcombine.high %v553, %v553
    %v574 = vpack.c.bf16 %v482, %v482
    %v575 = vpack.c.bf16 %v496, %v496
    %v576 = vpack.c.bf16 %v504, %v504
    %v577 = vpack.c.bf16 %v506, %v506
    %v578 = vpack.c.bf16 %v489, %v489
    %v579 = vpack.c.bf16 %v503, %v503
    %v580 = vpack.c.bf16 %v505, %v505
    %v581 = vpack.c.bf16 %v507, %v507
    %v582 = vpack.c.bf16 %v532, %v532
    %v583 = vpack.c.bf16 %v546, %v546
    %v584 = vpack.c.bf16 %v554, %v554
    %v585 = vpack.c.bf16 %v556, %v556
    %v586 = vpack.c.bf16 %v539, %v539
    %v587 = vpack.c.bf16 %v553, %v553
    %v588 = vpack.c.bf16 %v555, %v555
    %v589 = vpack.c.bf16 %v557, %v557
    %v590 = vld [vmem:[%s4] sm:$0xf]
    %v591 = vld [vmem:[%s4 + $0x4] sm:$0xf]
    %v592 = vld [vmem:[%s4 + $0x8] sm:$0xf]
    %v593 = vld [vmem:[%s4 + $0xc] sm:$0xf]
    %v594 = vld [vmem:[%s4 + $0x10] sm:$0xf]
    %v595 = vld [vmem:[%s4 + $0x14] sm:$0xf]
    %v596 = vld [vmem:[%s4 + $0x18] sm:$0xf]
    %v597 = vld [vmem:[%s4 + $0x1c] sm:$0xf]
    %v598 = vld [vmem:[%s4 + $0x20] sm:$0xf]
    %v599 = vld [vmem:[%s4 + $0x24] sm:$0xf]
    %v600 = vld [vmem:[%s4 + $0x28] sm:$0xf]
    %v601 = vld [vmem:[%s4 + $0x2c] sm:$0xf]
    %v602 = vld [vmem:[%s4 + $0x30] sm:$0xf]
    %v603 = vld [vmem:[%s4 + $0x34] sm:$0xf]
    %v604 = vld [vmem:[%s4 + $0x38] sm:$0xf]
    %v605 = vld [vmem:[%s4 + $0x3c] sm:$0xf]
    %v606 = vld [vmem:[%s4 + $0x40] sm:$0xf]
    %v607 = vld [vmem:[%s4 + $0x44] sm:$0xf]
    %v608 = vld [vmem:[%s4 + $0x48] sm:$0xf]
    %v609 = vld [vmem:[%s4 + $0x4c] sm:$0xf]
    %v610 = vld [vmem:[%s4 + $0x50] sm:$0xf]
    %v611 = vld [vmem:[%s4 + $0x54] sm:$0xf]
    %v612 = vld [vmem:[%s4 + $0x58] sm:$0xf]
    %v613 = vld [vmem:[%s4 + $0x5c] sm:$0xf]
    %v614 = vld [vmem:[%s4 + $0x60] sm:$0xf]
    %v615 = vld [vmem:[%s4 + $0x64] sm:$0xf]
    %v616 = vld [vmem:[%s4 + $0x68] sm:$0xf]
    %v617 = vld [vmem:[%s4 + $0x6c] sm:$0xf]
    %v618 = vld [vmem:[%s4 + $0x70] sm:$0xf]
    %v619 = vld [vmem:[%s4 + $0x74] sm:$0xf]
    %v620 = vld [vmem:[%s4 + $0x78] sm:$0xf]
    %v621 = vld [vmem:[%s4 + $0x7c] sm:$0xf]
    %v622 = vld [vmem:[%s4 + $0x80] sm:$0xf]
    %v623 = vld [vmem:[%s4 + $0x84] sm:$0xf]
    %v624 = vld [vmem:[%s4 + $0x88] sm:$0xf]
    %v625 = vld [vmem:[%s4 + $0x8c] sm:$0xf]
    %v626 = vld [vmem:[%s4 + $0x90] sm:$0xf]
    %v627 = vld [vmem:[%s4 + $0x94] sm:$0xf]
    %v628 = vld [vmem:[%s4 + $0x98] sm:$0xf]
    %v629 = vld [vmem:[%s4 + $0x9c] sm:$0xf]
    %v630 = vld [vmem:[%s4 + $0xa0] sm:$0xf]
    %v631 = vld [vmem:[%s4 + $0xa4] sm:$0xf]
    %v632 = vld [vmem:[%s4 + $0xa8] sm:$0xf]
    %v633 = vld [vmem:[%s4 + $0xac] sm:$0xf]
    %v634 = vld [vmem:[%s4 + $0xb0] sm:$0xf]
    %v635 = vld [vmem:[%s4 + $0xb4] sm:$0xf]
    %v636 = vld [vmem:[%s4 + $0xb8] sm:$0xf]
    %v637 = vld [vmem:[%s4 + $0xbc] sm:$0xf]
    %v638 = vld [vmem:[%s4 + $0xc0] sm:$0xf]
    %v639 = vld [vmem:[%s4 + $0xc4] sm:$0xf]
    %v640 = vld [vmem:[%s4 + $0xc8] sm:$0xf]
    %v641 = vld [vmem:[%s4 + $0xcc] sm:$0xf]
    %v642 = vld [vmem:[%s4 + $0xd0] sm:$0xf]
    %v643 = vld [vmem:[%s4 + $0xd4] sm:$0xf]
    %v644 = vld [vmem:[%s4 + $0xd8] sm:$0xf]
    %v645 = vld [vmem:[%s4 + $0xdc] sm:$0xf]
    %v646 = vld [vmem:[%s4 + $0xe0] sm:$0xf]
    %v647 = vld [vmem:[%s4 + $0xe4] sm:$0xf]
    %v648 = vld [vmem:[%s4 + $0xe8] sm:$0xf]
    %v649 = vld [vmem:[%s4 + $0xec] sm:$0xf]
    %v650 = vld [vmem:[%s4 + $0xf0] sm:$0xf]
    %v651 = vld [vmem:[%s4 + $0xf4] sm:$0xf]
    %v652 = vld [vmem:[%s4 + $0xf8] sm:$0xf]
    %v653 = vld [vmem:[%s4 + $0xfc] sm:$0xf]
    %v654 = vld [vmem:[%s4 + $0x100] sm:$0xf]
    %v655 = vld [vmem:[%s4 + $0x104] sm:$0xf]
    %v656 = vld [vmem:[%s4 + $0x108] sm:$0xf]
    %v657 = vld [vmem:[%s4 + $0x10c] sm:$0xf]
    %v658 = vld [vmem:[%s4 + $0x110] sm:$0xf]
    %v659 = vld [vmem:[%s4 + $0x114] sm:$0xf]
    %v660 = vld [vmem:[%s4 + $0x118] sm:$0xf]
    %v661 = vld [vmem:[%s4 + $0x11c] sm:$0xf]
    %v662 = vld [vmem:[%s4 + $0x120] sm:$0xf]
    %v663 = vld [vmem:[%s4 + $0x124] sm:$0xf]
    %v664 = vld [vmem:[%s4 + $0x128] sm:$0xf]
    %v665 = vld [vmem:[%s4 + $0x12c] sm:$0xf]
    %v666 = vld [vmem:[%s4 + $0x130] sm:$0xf]
    %v667 = vld [vmem:[%s4 + $0x134] sm:$0xf]
    %v668 = vld [vmem:[%s4 + $0x138] sm:$0xf]
    %v669 = vld [vmem:[%s4 + $0x13c] sm:$0xf]
    %v670 = vld [vmem:[%s4 + $0x140] sm:$0xf]
    %v671 = vld [vmem:[%s4 + $0x144] sm:$0xf]
    %v672 = vld [vmem:[%s4 + $0x148] sm:$0xf]
    %v673 = vld [vmem:[%s4 + $0x14c] sm:$0xf]
    %v674 = vld [vmem:[%s4 + $0x150] sm:$0xf]
    %v675 = vld [vmem:[%s4 + $0x154] sm:$0xf]
    %v676 = vld [vmem:[%s4 + $0x158] sm:$0xf]
    %v677 = vld [vmem:[%s4 + $0x15c] sm:$0xf]
    %v678 = vld [vmem:[%s4 + $0x160] sm:$0xf]
    %v679 = vld [vmem:[%s4 + $0x164] sm:$0xf]
    %v680 = vld [vmem:[%s4 + $0x168] sm:$0xf]
    %v681 = vld [vmem:[%s4 + $0x16c] sm:$0xf]
    %v682 = vld [vmem:[%s4 + $0x170] sm:$0xf]
    %v683 = vld [vmem:[%s4 + $0x174] sm:$0xf]
    %v684 = vld [vmem:[%s4 + $0x178] sm:$0xf]
    %v685 = vld [vmem:[%s4 + $0x17c] sm:$0xf]
    %v686 = vld [vmem:[%s4 + $0x180] sm:$0xf]
    %v687 = vld [vmem:[%s4 + $0x184] sm:$0xf]
    %v688 = vld [vmem:[%s4 + $0x188] sm:$0xf]
    %v689 = vld [vmem:[%s4 + $0x18c] sm:$0xf]
    %v690 = vld [vmem:[%s4 + $0x190] sm:$0xf]
    %v691 = vld [vmem:[%s4 + $0x194] sm:$0xf]
    %v692 = vld [vmem:[%s4 + $0x198] sm:$0xf]
    %v693 = vld [vmem:[%s4 + $0x19c] sm:$0xf]
    %v694 = vld [vmem:[%s4 + $0x1a0] sm:$0xf]
    %v695 = vld [vmem:[%s4 + $0x1a4] sm:$0xf]
    %v696 = vld [vmem:[%s4 + $0x1a8] sm:$0xf]
    %v697 = vld [vmem:[%s4 + $0x1ac] sm:$0xf]
    %v698 = vld [vmem:[%s4 + $0x1b0] sm:$0xf]
    %v699 = vld [vmem:[%s4 + $0x1b4] sm:$0xf]
    %v700 = vld [vmem:[%s4 + $0x1b8] sm:$0xf]
    %v701 = vld [vmem:[%s4 + $0x1bc] sm:$0xf]
    %v702 = vld [vmem:[%s4 + $0x1c0] sm:$0xf]
    %v703 = vld [vmem:[%s4 + $0x1c4] sm:$0xf]
    %v704 = vld [vmem:[%s4 + $0x1c8] sm:$0xf]
    %v705 = vld [vmem:[%s4 + $0x1cc] sm:$0xf]
    %v706 = vld [vmem:[%s4 + $0x1d0] sm:$0xf]
    %v707 = vld [vmem:[%s4 + $0x1d4] sm:$0xf]
    %v708 = vld [vmem:[%s4 + $0x1d8] sm:$0xf]
    %v709 = vld [vmem:[%s4 + $0x1dc] sm:$0xf]
    %v710 = vld [vmem:[%s4 + $0x1e0] sm:$0xf]
    %v711 = vld [vmem:[%s4 + $0x1e4] sm:$0xf]
    %v712 = vld [vmem:[%s4 + $0x1e8] sm:$0xf]
    %v713 = vld [vmem:[%s4 + $0x1ec] sm:$0xf]
    %v714 = vld [vmem:[%s4 + $0x1f0] sm:$0xf]
    %v715 = vld [vmem:[%s4 + $0x1f4] sm:$0xf]
    %v716 = vld [vmem:[%s4 + $0x1f8] sm:$0xf]
    %v717 = vld [vmem:[%s4 + $0x1fc] sm:$0xf]
    %v718 = vld [vmem:[%s4 + $0x200] sm:$0xf]
    %v719 = vld [vmem:[%s4 + $0x204] sm:$0xf]
    %v720 = vld [vmem:[%s4 + $0x208] sm:$0xf]
    %v721 = vld [vmem:[%s4 + $0x20c] sm:$0xf]
    %v722 = vld [vmem:[%s4 + $0x210] sm:$0xf]
    %v723 = vld [vmem:[%s4 + $0x214] sm:$0xf]
    %v724 = vld [vmem:[%s4 + $0x218] sm:$0xf]
    %v725 = vld [vmem:[%s4 + $0x21c] sm:$0xf]
    %v726 = vld [vmem:[%s4 + $0x220] sm:$0xf]
    %v727 = vld [vmem:[%s4 + $0x224] sm:$0xf]
    %v728 = vld [vmem:[%s4 + $0x228] sm:$0xf]
    %v729 = vld [vmem:[%s4 + $0x22c] sm:$0xf]
    %v730 = vld [vmem:[%s4 + $0x230] sm:$0xf]
    %v731 = vld [vmem:[%s4 + $0x234] sm:$0xf]
    %v732 = vld [vmem:[%s4 + $0x238] sm:$0xf]
    %v733 = vld [vmem:[%s4 + $0x23c] sm:$0xf]
    %v734 = vld [vmem:[%s4 + $0x240] sm:$0xf]
    %v735 = vld [vmem:[%s4 + $0x244] sm:$0xf]
    %v736 = vld [vmem:[%s4 + $0x248] sm:$0xf]
    %v737 = vld [vmem:[%s4 + $0x24c] sm:$0xf]
    %v738 = vld [vmem:[%s4 + $0x250] sm:$0xf]
    %v739 = vld [vmem:[%s4 + $0x254] sm:$0xf]
    %v740 = vld [vmem:[%s4 + $0x258] sm:$0xf]
    %v741 = vld [vmem:[%s4 + $0x25c] sm:$0xf]
    %v742 = vld [vmem:[%s4 + $0x260] sm:$0xf]
    %v743 = vld [vmem:[%s4 + $0x264] sm:$0xf]
    %v744 = vld [vmem:[%s4 + $0x268] sm:$0xf]
    %v745 = vld [vmem:[%s4 + $0x26c] sm:$0xf]
    %v746 = vld [vmem:[%s4 + $0x270] sm:$0xf]
    %v747 = vld [vmem:[%s4 + $0x274] sm:$0xf]
    %v748 = vld [vmem:[%s4 + $0x278] sm:$0xf]
    %v749 = vld [vmem:[%s4 + $0x27c] sm:$0xf]
    %v750 = vld [vmem:[%s4 + $0x280] sm:$0xf]
    %v751 = vld [vmem:[%s4 + $0x284] sm:$0xf]
    %v752 = vld [vmem:[%s4 + $0x288] sm:$0xf]
    %v753 = vld [vmem:[%s4 + $0x28c] sm:$0xf]
    %v754 = vld [vmem:[%s4 + $0x290] sm:$0xf]
    %v755 = vld [vmem:[%s4 + $0x294] sm:$0xf]
    %v756 = vld [vmem:[%s4 + $0x298] sm:$0xf]
    %v757 = vld [vmem:[%s4 + $0x29c] sm:$0xf]
    %v758 = vld [vmem:[%s4 + $0x2a0] sm:$0xf]
    %v759 = vld [vmem:[%s4 + $0x2a4] sm:$0xf]
    %v760 = vld [vmem:[%s4 + $0x2a8] sm:$0xf]
    %v761 = vld [vmem:[%s4 + $0x2ac] sm:$0xf]
    %v762 = vld [vmem:[%s4 + $0x2b0] sm:$0xf]
    %v763 = vld [vmem:[%s4 + $0x2b4] sm:$0xf]
    %v764 = vld [vmem:[%s4 + $0x2b8] sm:$0xf]
    %v765 = vld [vmem:[%s4 + $0x2bc] sm:$0xf]
    %v766 = vld [vmem:[%s4 + $0x2c0] sm:$0xf]
    %v767 = vld [vmem:[%s4 + $0x2c4] sm:$0xf]
    %v768 = vld [vmem:[%s4 + $0x2c8] sm:$0xf]
    %v769 = vld [vmem:[%s4 + $0x2cc] sm:$0xf]
    %v770 = vld [vmem:[%s4 + $0x2d0] sm:$0xf]
    %v771 = vld [vmem:[%s4 + $0x2d4] sm:$0xf]
    %v772 = vld [vmem:[%s4 + $0x2d8] sm:$0xf]
    %v773 = vld [vmem:[%s4 + $0x2dc] sm:$0xf]
    %v774 = vld [vmem:[%s4 + $0x2e0] sm:$0xf]
    %v775 = vld [vmem:[%s4 + $0x2e4] sm:$0xf]
    %v776 = vld [vmem:[%s4 + $0x2e8] sm:$0xf]
    %v777 = vld [vmem:[%s4 + $0x2ec] sm:$0xf]
    %v778 = vld [vmem:[%s4 + $0x2f0] sm:$0xf]
    %v779 = vld [vmem:[%s4 + $0x2f4] sm:$0xf]
    %v780 = vld [vmem:[%s4 + $0x2f8] sm:$0xf]
    %v781 = vld [vmem:[%s4 + $0x2fc] sm:$0xf]
    %v782 = vld [vmem:[%s4 + $0x300] sm:$0xf]
    %v783 = vld [vmem:[%s4 + $0x304] sm:$0xf]
    %v784 = vld [vmem:[%s4 + $0x308] sm:$0xf]
    %v785 = vld [vmem:[%s4 + $0x30c] sm:$0xf]
    %v786 = vld [vmem:[%s4 + $0x310] sm:$0xf]
    %v787 = vld [vmem:[%s4 + $0x314] sm:$0xf]
    %v788 = vld [vmem:[%s4 + $0x318] sm:$0xf]
    %v789 = vld [vmem:[%s4 + $0x31c] sm:$0xf]
    %v790 = vld [vmem:[%s4 + $0x320] sm:$0xf]
    %v791 = vld [vmem:[%s4 + $0x324] sm:$0xf]
    %v792 = vld [vmem:[%s4 + $0x328] sm:$0xf]
    %v793 = vld [vmem:[%s4 + $0x32c] sm:$0xf]
    %v794 = vld [vmem:[%s4 + $0x330] sm:$0xf]
    %v795 = vld [vmem:[%s4 + $0x334] sm:$0xf]
    %v796 = vld [vmem:[%s4 + $0x338] sm:$0xf]
    %v797 = vld [vmem:[%s4 + $0x33c] sm:$0xf]
    %v798 = vld [vmem:[%s4 + $0x340] sm:$0xf]
    %v799 = vld [vmem:[%s4 + $0x344] sm:$0xf]
    %v800 = vld [vmem:[%s4 + $0x348] sm:$0xf]
    %v801 = vld [vmem:[%s4 + $0x34c] sm:$0xf]
    %v802 = vld [vmem:[%s4 + $0x350] sm:$0xf]
    %v803 = vld [vmem:[%s4 + $0x354] sm:$0xf]
    %v804 = vld [vmem:[%s4 + $0x358] sm:$0xf]
    %v805 = vld [vmem:[%s4 + $0x35c] sm:$0xf]
    %v806 = vld [vmem:[%s4 + $0x360] sm:$0xf]
    %v807 = vld [vmem:[%s4 + $0x364] sm:$0xf]
    %v808 = vld [vmem:[%s4 + $0x368] sm:$0xf]
    %v809 = vld [vmem:[%s4 + $0x36c] sm:$0xf]
    %v810 = vld [vmem:[%s4 + $0x370] sm:$0xf]
    %v811 = vld [vmem:[%s4 + $0x374] sm:$0xf]
    %v812 = vld [vmem:[%s4 + $0x378] sm:$0xf]
    %v813 = vld [vmem:[%s4 + $0x37c] sm:$0xf]
    %v814 = vld [vmem:[%s4 + $0x380] sm:$0xf]
    %v815 = vld [vmem:[%s4 + $0x384] sm:$0xf]
    %v816 = vld [vmem:[%s4 + $0x388] sm:$0xf]
    %v817 = vld [vmem:[%s4 + $0x38c] sm:$0xf]
    %v818 = vld [vmem:[%s4 + $0x390] sm:$0xf]
    %v819 = vld [vmem:[%s4 + $0x394] sm:$0xf]
    %v820 = vld [vmem:[%s4 + $0x398] sm:$0xf]
    %v821 = vld [vmem:[%s4 + $0x39c] sm:$0xf]
    %v822 = vld [vmem:[%s4 + $0x3a0] sm:$0xf]
    %v823 = vld [vmem:[%s4 + $0x3a4] sm:$0xf]
    %v824 = vld [vmem:[%s4 + $0x3a8] sm:$0xf]
    %v825 = vld [vmem:[%s4 + $0x3ac] sm:$0xf]
    %v826 = vld [vmem:[%s4 + $0x3b0] sm:$0xf]
    %v827 = vld [vmem:[%s4 + $0x3b4] sm:$0xf]
    %v828 = vld [vmem:[%s4 + $0x3b8] sm:$0xf]
    %v829 = vld [vmem:[%s4 + $0x3bc] sm:$0xf]
    %v830 = vld [vmem:[%s4 + $0x3c0] sm:$0xf]
    %v831 = vld [vmem:[%s4 + $0x3c4] sm:$0xf]
    %v832 = vld [vmem:[%s4 + $0x3c8] sm:$0xf]
    %v833 = vld [vmem:[%s4 + $0x3cc] sm:$0xf]
    %v834 = vld [vmem:[%s4 + $0x3d0] sm:$0xf]
    %v835 = vld [vmem:[%s4 + $0x3d4] sm:$0xf]
    %v836 = vld [vmem:[%s4 + $0x3d8] sm:$0xf]
    %v837 = vld [vmem:[%s4 + $0x3dc] sm:$0xf]
    %v838 = vld [vmem:[%s4 + $0x3e0] sm:$0xf]
    %v839 = vld [vmem:[%s4 + $0x3e4] sm:$0xf]
    %v840 = vld [vmem:[%s4 + $0x3e8] sm:$0xf]
    %v841 = vld [vmem:[%s4 + $0x3ec] sm:$0xf]
    %v842 = vld [vmem:[%s4 + $0x3f0] sm:$0xf]
    %v843 = vld [vmem:[%s4 + $0x3f4] sm:$0xf]
    %v844 = vld [vmem:[%s4 + $0x3f8] sm:$0xf]
    %v845 = vld [vmem:[%s4 + $0x3fc] sm:$0xf]
    %v846 = vld [vmem:[%s5] sm:$0x1]
    %v848 = vlaneseq
    %v849 = vshrl.u32 %v848, 7
    %v850 = vsub.s32 0, %v849
    %v851 = vrot.slane %v846, %v850
    %v1109 = vunpack.c.l.b16 %v590
    %v1110 = vunpack.c.l.b16 %v591
    %v1111 = vunpack.c.l.b16 %v592
    %v1112 = vunpack.c.l.b16 %v593
    %v1113 = vunpack.c.l.b16 %v594
    %v1114 = vunpack.c.l.b16 %v595
    %v1115 = vunpack.c.l.b16 %v596
    %v1116 = vunpack.c.l.b16 %v597
    %v1117 = vunpack.c.l.b16 %v598
    %v1118 = vunpack.c.l.b16 %v599
    %v1119 = vunpack.c.l.b16 %v600
    %v1120 = vunpack.c.l.b16 %v601
    %v1121 = vunpack.c.l.b16 %v602
    %v1122 = vunpack.c.l.b16 %v603
    %v1123 = vunpack.c.l.b16 %v604
    %v1124 = vunpack.c.l.b16 %v605
    %v1125 = vunpack.c.l.b16 %v606
    %v1126 = vunpack.c.l.b16 %v607
    %v1127 = vunpack.c.l.b16 %v608
    %v1128 = vunpack.c.l.b16 %v609
    %v1129 = vunpack.c.l.b16 %v610
    %v1130 = vunpack.c.l.b16 %v611
    %v1131 = vunpack.c.l.b16 %v612
    %v1132 = vunpack.c.l.b16 %v613
    %v1133 = vunpack.c.l.b16 %v614
    %v1134 = vunpack.c.l.b16 %v615
    %v1135 = vunpack.c.l.b16 %v616
    %v1136 = vunpack.c.l.b16 %v617
    %v1137 = vunpack.c.l.b16 %v618
    %v1138 = vunpack.c.l.b16 %v619
    %v1139 = vunpack.c.l.b16 %v620
    %v1140 = vunpack.c.l.b16 %v621
    %v1141 = vunpack.c.l.b16 %v622
    %v1142 = vunpack.c.l.b16 %v623
    %v1143 = vunpack.c.l.b16 %v624
    %v1144 = vunpack.c.l.b16 %v625
    %v1145 = vunpack.c.l.b16 %v626
    %v1146 = vunpack.c.l.b16 %v627
    %v1147 = vunpack.c.l.b16 %v628
    %v1148 = vunpack.c.l.b16 %v629
    %v1149 = vunpack.c.l.b16 %v630
    %v1150 = vunpack.c.l.b16 %v631
    %v1151 = vunpack.c.l.b16 %v632
    %v1152 = vunpack.c.l.b16 %v633
    %v1153 = vunpack.c.l.b16 %v634
    %v1154 = vunpack.c.l.b16 %v635
    %v1155 = vunpack.c.l.b16 %v636
    %v1156 = vunpack.c.l.b16 %v637
    %v1157 = vunpack.c.l.b16 %v638
    %v1158 = vunpack.c.l.b16 %v639
    %v1159 = vunpack.c.l.b16 %v640
    %v1160 = vunpack.c.l.b16 %v641
    %v1161 = vunpack.c.l.b16 %v642
    %v1162 = vunpack.c.l.b16 %v643
    %v1163 = vunpack.c.l.b16 %v644
    %v1164 = vunpack.c.l.b16 %v645
    %v1165 = vunpack.c.l.b16 %v646
    %v1166 = vunpack.c.l.b16 %v647
    %v1167 = vunpack.c.l.b16 %v648
    %v1168 = vunpack.c.l.b16 %v649
    %v1169 = vunpack.c.l.b16 %v650
    %v1170 = vunpack.c.l.b16 %v651
    %v1171 = vunpack.c.l.b16 %v652
    %v1172 = vunpack.c.l.b16 %v653
    %v1173 = vunpack.c.l.b16 %v654
    %v1174 = vunpack.c.l.b16 %v655
    %v1175 = vunpack.c.l.b16 %v656
    %v1176 = vunpack.c.l.b16 %v657
    %v1177 = vunpack.c.l.b16 %v658
    %v1178 = vunpack.c.l.b16 %v659
    %v1179 = vunpack.c.l.b16 %v660
    %v1180 = vunpack.c.l.b16 %v661
    %v1181 = vunpack.c.l.b16 %v662
    %v1182 = vunpack.c.l.b16 %v663
    %v1183 = vunpack.c.l.b16 %v664
    %v1184 = vunpack.c.l.b16 %v665
    %v1185 = vunpack.c.l.b16 %v666
    %v1186 = vunpack.c.l.b16 %v667
    %v1187 = vunpack.c.l.b16 %v668
    %v1188 = vunpack.c.l.b16 %v669
    %v1189 = vunpack.c.l.b16 %v670
    %v1190 = vunpack.c.l.b16 %v671
    %v1191 = vunpack.c.l.b16 %v672
    %v1192 = vunpack.c.l.b16 %v673
    %v1193 = vunpack.c.l.b16 %v674
    %v1194 = vunpack.c.l.b16 %v675
    %v1195 = vunpack.c.l.b16 %v676
    %v1196 = vunpack.c.l.b16 %v677
    %v1197 = vunpack.c.l.b16 %v678
    %v1198 = vunpack.c.l.b16 %v679
    %v1199 = vunpack.c.l.b16 %v680
    %v1200 = vunpack.c.l.b16 %v681
    %v1201 = vunpack.c.l.b16 %v682
    %v1202 = vunpack.c.l.b16 %v683
    %v1203 = vunpack.c.l.b16 %v684
    %v1204 = vunpack.c.l.b16 %v685
    %v1205 = vunpack.c.l.b16 %v686
    %v1206 = vunpack.c.l.b16 %v687
    %v1207 = vunpack.c.l.b16 %v688
    %v1208 = vunpack.c.l.b16 %v689
    %v1209 = vunpack.c.l.b16 %v690
    %v1210 = vunpack.c.l.b16 %v691
    %v1211 = vunpack.c.l.b16 %v692
    %v1212 = vunpack.c.l.b16 %v693
    %v1213 = vunpack.c.l.b16 %v694
    %v1214 = vunpack.c.l.b16 %v695
    %v1215 = vunpack.c.l.b16 %v696
    %v1216 = vunpack.c.l.b16 %v697
    %v1217 = vunpack.c.l.b16 %v698
    %v1218 = vunpack.c.l.b16 %v699
    %v1219 = vunpack.c.l.b16 %v700
    %v1220 = vunpack.c.l.b16 %v701
    %v1221 = vunpack.c.l.b16 %v702
    %v1222 = vunpack.c.l.b16 %v703
    %v1223 = vunpack.c.l.b16 %v704
    %v1224 = vunpack.c.l.b16 %v705
    %v1225 = vunpack.c.l.b16 %v706
    %v1226 = vunpack.c.l.b16 %v707
    %v1227 = vunpack.c.l.b16 %v708
    %v1228 = vunpack.c.l.b16 %v709
    %v1229 = vunpack.c.l.b16 %v710
    %v1230 = vunpack.c.l.b16 %v711
    %v1231 = vunpack.c.l.b16 %v712
    %v1232 = vunpack.c.l.b16 %v713
    %v1233 = vunpack.c.l.b16 %v714
    %v1234 = vunpack.c.l.b16 %v715
    %v1235 = vunpack.c.l.b16 %v716
    %v1236 = vunpack.c.l.b16 %v717
    %v1237 = vunpack.c.l.b16 %v718
    %v1238 = vunpack.c.l.b16 %v719
    %v1239 = vunpack.c.l.b16 %v720
    %v1240 = vunpack.c.l.b16 %v721
    %v1241 = vunpack.c.l.b16 %v722
    %v1242 = vunpack.c.l.b16 %v723
    %v1243 = vunpack.c.l.b16 %v724
    %v1244 = vunpack.c.l.b16 %v725
    %v1245 = vunpack.c.l.b16 %v726
    %v1246 = vunpack.c.l.b16 %v727
    %v1247 = vunpack.c.l.b16 %v728
    %v1248 = vunpack.c.l.b16 %v729
    %v1249 = vunpack.c.l.b16 %v730
    %v1250 = vunpack.c.l.b16 %v731
    %v1251 = vunpack.c.l.b16 %v732
    %v1252 = vunpack.c.l.b16 %v733
    %v1253 = vunpack.c.l.b16 %v734
    %v1254 = vunpack.c.l.b16 %v735
    %v1255 = vunpack.c.l.b16 %v736
    %v1256 = vunpack.c.l.b16 %v737
    %v1257 = vunpack.c.l.b16 %v738
    %v1258 = vunpack.c.l.b16 %v739
    %v1259 = vunpack.c.l.b16 %v740
    %v1260 = vunpack.c.l.b16 %v741
    %v1261 = vunpack.c.l.b16 %v742
    %v1262 = vunpack.c.l.b16 %v743
    %v1263 = vunpack.c.l.b16 %v744
    %v1264 = vunpack.c.l.b16 %v745
    %v1265 = vunpack.c.l.b16 %v746
    %v1266 = vunpack.c.l.b16 %v747
    %v1267 = vunpack.c.l.b16 %v748
    %v1268 = vunpack.c.l.b16 %v749
    %v1269 = vunpack.c.l.b16 %v750
    %v1270 = vunpack.c.l.b16 %v751
    %v1271 = vunpack.c.l.b16 %v752
    %v1272 = vunpack.c.l.b16 %v753
    %v1273 = vunpack.c.l.b16 %v754
    %v1274 = vunpack.c.l.b16 %v755
    %v1275 = vunpack.c.l.b16 %v756
    %v1276 = vunpack.c.l.b16 %v757
    %v1277 = vunpack.c.l.b16 %v758
    %v1278 = vunpack.c.l.b16 %v759
    %v1279 = vunpack.c.l.b16 %v760
    %v1280 = vunpack.c.l.b16 %v761
    %v1281 = vunpack.c.l.b16 %v762
    %v1282 = vunpack.c.l.b16 %v763
    %v1283 = vunpack.c.l.b16 %v764
    %v1284 = vunpack.c.l.b16 %v765
    %v1285 = vunpack.c.l.b16 %v766
    %v1286 = vunpack.c.l.b16 %v767
    %v1287 = vunpack.c.l.b16 %v768
    %v1288 = vunpack.c.l.b16 %v769
    %v1289 = vunpack.c.l.b16 %v770
    %v1290 = vunpack.c.l.b16 %v771
    %v1291 = vunpack.c.l.b16 %v772
    %v1292 = vunpack.c.l.b16 %v773
    %v1293 = vunpack.c.l.b16 %v774
    %v1294 = vunpack.c.l.b16 %v775
    %v1295 = vunpack.c.l.b16 %v776
    %v1296 = vunpack.c.l.b16 %v777
    %v1297 = vunpack.c.l.b16 %v778
    %v1298 = vunpack.c.l.b16 %v779
    %v1299 = vunpack.c.l.b16 %v780
    %v1300 = vunpack.c.l.b16 %v781
    %v1301 = vunpack.c.l.b16 %v782
    %v1302 = vunpack.c.l.b16 %v783
    %v1303 = vunpack.c.l.b16 %v784
    %v1304 = vunpack.c.l.b16 %v785
    %v1305 = vunpack.c.l.b16 %v786
    %v1306 = vunpack.c.l.b16 %v787
    %v1307 = vunpack.c.l.b16 %v788
    %v1308 = vunpack.c.l.b16 %v789
    %v1309 = vunpack.c.l.b16 %v790
    %v1310 = vunpack.c.l.b16 %v791
    %v1311 = vunpack.c.l.b16 %v792
    %v1312 = vunpack.c.l.b16 %v793
    %v1313 = vunpack.c.l.b16 %v794
    %v1314 = vunpack.c.l.b16 %v795
    %v1315 = vunpack.c.l.b16 %v796
    %v1316 = vunpack.c.l.b16 %v797
    %v1317 = vunpack.c.l.b16 %v798
    %v1318 = vunpack.c.l.b16 %v799
    %v1319 = vunpack.c.l.b16 %v800
    %v1320 = vunpack.c.l.b16 %v801
    %v1321 = vunpack.c.l.b16 %v802
    %v1322 = vunpack.c.l.b16 %v803
    %v1323 = vunpack.c.l.b16 %v804
    %v1324 = vunpack.c.l.b16 %v805
    %v1325 = vunpack.c.l.b16 %v806
    %v1326 = vunpack.c.l.b16 %v807
    %v1327 = vunpack.c.l.b16 %v808
    %v1328 = vunpack.c.l.b16 %v809
    %v1329 = vunpack.c.l.b16 %v810
    %v1330 = vunpack.c.l.b16 %v811
    %v1331 = vunpack.c.l.b16 %v812
    %v1332 = vunpack.c.l.b16 %v813
    %v1333 = vunpack.c.l.b16 %v814
    %v1334 = vunpack.c.l.b16 %v815
    %v1335 = vunpack.c.l.b16 %v816
    %v1336 = vunpack.c.l.b16 %v817
    %v1337 = vunpack.c.l.b16 %v818
    %v1338 = vunpack.c.l.b16 %v819
    %v1339 = vunpack.c.l.b16 %v820
    %v1340 = vunpack.c.l.b16 %v821
    %v1341 = vunpack.c.l.b16 %v822
    %v1342 = vunpack.c.l.b16 %v823
    %v1343 = vunpack.c.l.b16 %v824
    %v1344 = vunpack.c.l.b16 %v825
    %v1345 = vunpack.c.l.b16 %v826
    %v1346 = vunpack.c.l.b16 %v827
    %v1347 = vunpack.c.l.b16 %v828
    %v1348 = vunpack.c.l.b16 %v829
    %v1349 = vunpack.c.l.b16 %v830
    %v1350 = vunpack.c.l.b16 %v831
    %v1351 = vunpack.c.l.b16 %v832
    %v1352 = vunpack.c.l.b16 %v833
    %v1353 = vunpack.c.l.b16 %v834
    %v1354 = vunpack.c.l.b16 %v835
    %v1355 = vunpack.c.l.b16 %v836
    %v1356 = vunpack.c.l.b16 %v837
    %v1357 = vunpack.c.l.b16 %v838
    %v1358 = vunpack.c.l.b16 %v839
    %v1359 = vunpack.c.l.b16 %v840
    %v1360 = vunpack.c.l.b16 %v841
    %v1361 = vunpack.c.l.b16 %v842
    %v1362 = vunpack.c.l.b16 %v843
    %v1363 = vunpack.c.l.b16 %v844
    %v1364 = vunpack.c.l.b16 %v845
    %v1365 = vpack.c.b16 %v1110, %v1109
    %v1366 = vpack.c.b16 %v1112, %v1111
    %v1367 = vpack.c.b16 %v1114, %v1113
    %v1368 = vpack.c.b16 %v1116, %v1115
    %v1369 = vpack.c.b16 %v1118, %v1117
    %v1370 = vpack.c.b16 %v1120, %v1119
    %v1371 = vpack.c.b16 %v1122, %v1121
    %v1372 = vpack.c.b16 %v1124, %v1123
    %v1373 = vpack.c.b16 %v1126, %v1125
    %v1374 = vpack.c.b16 %v1128, %v1127
    %v1375 = vpack.c.b16 %v1130, %v1129
    %v1376 = vpack.c.b16 %v1132, %v1131
    %v1377 = vpack.c.b16 %v1134, %v1133
    %v1378 = vpack.c.b16 %v1136, %v1135
    %v1379 = vpack.c.b16 %v1138, %v1137
    %v1380 = vpack.c.b16 %v1140, %v1139
    %v1381 = vpack.c.b16 %v1142, %v1141
    %v1382 = vpack.c.b16 %v1144, %v1143
    %v1383 = vpack.c.b16 %v1146, %v1145
    %v1384 = vpack.c.b16 %v1148, %v1147
    %v1385 = vpack.c.b16 %v1150, %v1149
    %v1386 = vpack.c.b16 %v1152, %v1151
    %v1387 = vpack.c.b16 %v1154, %v1153
    %v1388 = vpack.c.b16 %v1156, %v1155
    %v1389 = vpack.c.b16 %v1158, %v1157
    %v1390 = vpack.c.b16 %v1160, %v1159
    %v1391 = vpack.c.b16 %v1162, %v1161
    %v1392 = vpack.c.b16 %v1164, %v1163
    %v1393 = vpack.c.b16 %v1166, %v1165
    %v1394 = vpack.c.b16 %v1168, %v1167
    %v1395 = vpack.c.b16 %v1170, %v1169
    %v1396 = vpack.c.b16 %v1172, %v1171
    %v1397 = vpack.c.b16 %v1174, %v1173
    %v1398 = vpack.c.b16 %v1176, %v1175
    %v1399 = vpack.c.b16 %v1178, %v1177
    %v1400 = vpack.c.b16 %v1180, %v1179
    %v1401 = vpack.c.b16 %v1182, %v1181
    %v1402 = vpack.c.b16 %v1184, %v1183
    %v1403 = vpack.c.b16 %v1186, %v1185
    %v1404 = vpack.c.b16 %v1188, %v1187
    %v1405 = vpack.c.b16 %v1190, %v1189
    %v1406 = vpack.c.b16 %v1192, %v1191
    %v1407 = vpack.c.b16 %v1194, %v1193
    %v1408 = vpack.c.b16 %v1196, %v1195
    %v1409 = vpack.c.b16 %v1198, %v1197
    %v1410 = vpack.c.b16 %v1200, %v1199
    %v1411 = vpack.c.b16 %v1202, %v1201
    %v1412 = vpack.c.b16 %v1204, %v1203
    %v1413 = vpack.c.b16 %v1206, %v1205
    %v1414 = vpack.c.b16 %v1208, %v1207
    %v1415 = vpack.c.b16 %v1210, %v1209
    %v1416 = vpack.c.b16 %v1212, %v1211
    %v1417 = vpack.c.b16 %v1214, %v1213
    %v1418 = vpack.c.b16 %v1216, %v1215
    %v1419 = vpack.c.b16 %v1218, %v1217
    %v1420 = vpack.c.b16 %v1220, %v1219
    %v1421 = vpack.c.b16 %v1222, %v1221
    %v1422 = vpack.c.b16 %v1224, %v1223
    %v1423 = vpack.c.b16 %v1226, %v1225
    %v1424 = vpack.c.b16 %v1228, %v1227
    %v1425 = vpack.c.b16 %v1230, %v1229
    %v1426 = vpack.c.b16 %v1232, %v1231
    %v1427 = vpack.c.b16 %v1234, %v1233
    %v1428 = vpack.c.b16 %v1236, %v1235
    %v1429 = vpack.c.b16 %v1238, %v1237
    %v1430 = vpack.c.b16 %v1240, %v1239
    %v1431 = vpack.c.b16 %v1242, %v1241
    %v1432 = vpack.c.b16 %v1244, %v1243
    %v1433 = vpack.c.b16 %v1246, %v1245
    %v1434 = vpack.c.b16 %v1248, %v1247
    %v1435 = vpack.c.b16 %v1250, %v1249
    %v1436 = vpack.c.b16 %v1252, %v1251
    %v1437 = vpack.c.b16 %v1254, %v1253
    %v1438 = vpack.c.b16 %v1256, %v1255
    %v1439 = vpack.c.b16 %v1258, %v1257
    %v1440 = vpack.c.b16 %v1260, %v1259
    %v1441 = vpack.c.b16 %v1262, %v1261
    %v1442 = vpack.c.b16 %v1264, %v1263
    %v1443 = vpack.c.b16 %v1266, %v1265
    %v1444 = vpack.c.b16 %v1268, %v1267
    %v1445 = vpack.c.b16 %v1270, %v1269
    %v1446 = vpack.c.b16 %v1272, %v1271
    %v1447 = vpack.c.b16 %v1274, %v1273
    %v1448 = vpack.c.b16 %v1276, %v1275
    %v1449 = vpack.c.b16 %v1278, %v1277
    %v1450 = vpack.c.b16 %v1280, %v1279
    %v1451 = vpack.c.b16 %v1282, %v1281
    %v1452 = vpack.c.b16 %v1284, %v1283
    %v1453 = vpack.c.b16 %v1286, %v1285
    %v1454 = vpack.c.b16 %v1288, %v1287
    %v1455 = vpack.c.b16 %v1290, %v1289
    %v1456 = vpack.c.b16 %v1292, %v1291
    %v1457 = vpack.c.b16 %v1294, %v1293
    %v1458 = vpack.c.b16 %v1296, %v1295
    %v1459 = vpack.c.b16 %v1298, %v1297
    %v1460 = vpack.c.b16 %v1300, %v1299
    %v1461 = vpack.c.b16 %v1302, %v1301
    %v1462 = vpack.c.b16 %v1304, %v1303
    %v1463 = vpack.c.b16 %v1306, %v1305
    %v1464 = vpack.c.b16 %v1308, %v1307
    %v1465 = vpack.c.b16 %v1310, %v1309
    %v1466 = vpack.c.b16 %v1312, %v1311
    %v1467 = vpack.c.b16 %v1314, %v1313
    %v1468 = vpack.c.b16 %v1316, %v1315
    %v1469 = vpack.c.b16 %v1318, %v1317
    %v1470 = vpack.c.b16 %v1320, %v1319
    %v1471 = vpack.c.b16 %v1322, %v1321
    %v1472 = vpack.c.b16 %v1324, %v1323
    %v1473 = vpack.c.b16 %v1326, %v1325
    %v1474 = vpack.c.b16 %v1328, %v1327
    %v1475 = vpack.c.b16 %v1330, %v1329
    %v1476 = vpack.c.b16 %v1332, %v1331
    %v1477 = vpack.c.b16 %v1334, %v1333
    %v1478 = vpack.c.b16 %v1336, %v1335
    %v1479 = vpack.c.b16 %v1338, %v1337
    %v1480 = vpack.c.b16 %v1340, %v1339
    %v1481 = vpack.c.b16 %v1342, %v1341
    %v1482 = vpack.c.b16 %v1344, %v1343
    %v1483 = vpack.c.b16 %v1346, %v1345
    %v1484 = vpack.c.b16 %v1348, %v1347
    %v1485 = vpack.c.b16 %v1350, %v1349
    %v1486 = vpack.c.b16 %v1352, %v1351
    %v1487 = vpack.c.b16 %v1354, %v1353
    %v1488 = vpack.c.b16 %v1356, %v1355
    %v1489 = vpack.c.b16 %v1358, %v1357
    %v1490 = vpack.c.b16 %v1360, %v1359
    %v1491 = vpack.c.b16 %v1362, %v1361
    %v1492 = vpack.c.b16 %v1364, %v1363
    %1621 = vmatprep.subr.bf16.mxu0 0
    %1622 = vmatpush1.bf16.msra.mxu0 %v1365
    %1623 = vmatprep.subr.bf16.mxu0 0
    %1624 = vmatpush1.bf16.msra.mxu0 %v1366
    %1625 = vmatprep.subr.bf16.mxu0 0
    %1626 = vmatpush1.bf16.msra.mxu0 %v1367
    %1627 = vmatprep.subr.bf16.mxu0 0
    %1628 = vmatpush1.bf16.msra.mxu0 %v1368
    %1629 = vmatprep.subr.bf16.mxu0 0
    %1630 = vmatpush1.bf16.msra.mxu0 %v1369
    %1631 = vmatprep.subr.bf16.mxu0 0
    %1632 = vmatpush1.bf16.msra.mxu0 %v1370
    %1633 = vmatprep.subr.bf16.mxu0 0
    %1634 = vmatpush1.bf16.msra.mxu0 %v1371
    %1635 = vmatprep.subr.bf16.mxu0 0
    %1636 = vmatpush1.bf16.msra.mxu0 %v1372
    %1637 = vmatprep.subr.bf16.mxu0 0
    %1638 = vmatpush1.bf16.msra.mxu0 %v1373
    %1639 = vmatprep.subr.bf16.mxu0 0
    %1640 = vmatpush1.bf16.msra.mxu0 %v1374
    %1641 = vmatprep.subr.bf16.mxu0 0
    %1642 = vmatpush1.bf16.msra.mxu0 %v1375
    %1643 = vmatprep.subr.bf16.mxu0 0
    %1644 = vmatpush1.bf16.msra.mxu0 %v1376
    %1645 = vmatprep.subr.bf16.mxu0 0
    %1646 = vmatpush1.bf16.msra.mxu0 %v1377
    %1647 = vmatprep.subr.bf16.mxu0 0
    %1648 = vmatpush1.bf16.msra.mxu0 %v1378
    %1649 = vmatprep.subr.bf16.mxu0 0
    %1650 = vmatpush1.bf16.msra.mxu0 %v1379
    %1651 = vmatprep.subr.bf16.mxu0 0
    %1652 = vmatpush1.bf16.msra.mxu0 %v1380
    %1653 = vmatprep.mubr.bf16.mxu0 %v575
    %1654 = vmatmul.mubr.bf16.gmra.mrb[0].mxu0 %v574
    %v1655 = vpop.f32.mrb[0].mxu0
    %v1656 = vadd.f32 %v851, %v1655
    %v1657 = vpop.f32.mrb[0].mxu0
    %v1658 = vpop.f32.mrb[0].mxu0
    %v1659 = vpop.f32.mrb[0].mxu0
    %1660 = vdwg.mxu0
    %1661 = vmatprep.subr.bf16.mxu0 0
    %1662 = vmatpush1.bf16.msra.mxu0 %v1381
    %1663 = vmatprep.subr.bf16.mxu0 0
    %1664 = vmatpush1.bf16.msra.mxu0 %v1382
    %1665 = vmatprep.subr.bf16.mxu0 0
    %1666 = vmatpush1.bf16.msra.mxu0 %v1383
    %1667 = vmatprep.subr.bf16.mxu0 0
    %1668 = vmatpush1.bf16.msra.mxu0 %v1384
    %1669 = vmatprep.subr.bf16.mxu0 0
    %1670 = vmatpush1.bf16.msra.mxu0 %v1385
    %1671 = vmatprep.subr.bf16.mxu0 0
    %1672 = vmatpush1.bf16.msra.mxu0 %v1386
    %1673 = vmatprep.subr.bf16.mxu0 0
    %1674 = vmatpush1.bf16.msra.mxu0 %v1387
    %1675 = vmatprep.subr.bf16.mxu0 0
    %1676 = vmatpush1.bf16.msra.mxu0 %v1388
    %1677 = vmatprep.subr.bf16.mxu0 0
    %1678 = vmatpush1.bf16.msra.mxu0 %v1389
    %1679 = vmatprep.subr.bf16.mxu0 0
    %1680 = vmatpush1.bf16.msra.mxu0 %v1390
    %1681 = vmatprep.subr.bf16.mxu0 0
    %1682 = vmatpush1.bf16.msra.mxu0 %v1391
    %1683 = vmatprep.subr.bf16.mxu0 0
    %1684 = vmatpush1.bf16.msra.mxu0 %v1392
    %1685 = vmatprep.subr.bf16.mxu0 0
    %1686 = vmatpush1.bf16.msra.mxu0 %v1393
    %1687 = vmatprep.subr.bf16.mxu0 0
    %1688 = vmatpush1.bf16.msra.mxu0 %v1394
    %1689 = vmatprep.subr.bf16.mxu0 0
    %1690 = vmatpush1.bf16.msra.mxu0 %v1395
    %1691 = vmatprep.subr.bf16.mxu0 0
    %1692 = vmatpush1.bf16.msra.mxu0 %v1396
    %1693 = vmatprep.mubr.bf16.mxu0 %v577
    %1694 = vmatmul.mubr.bf16.gmra.mrb[0].mxu0 %v576
    %v1695 = vpop.f32.mrb[0].mxu0
    %v1696 = vadd.f32 %v1656, %v1695
    %v1697 = vpop.f32.mrb[0].mxu0
    %v1698 = vpop.f32.mrb[0].mxu0
    %v1699 = vpop.f32.mrb[0].mxu0
    %1700 = vdwg.mxu0
    %1701 = vmatprep.subr.bf16.mxu0 0
    %1702 = vmatpush1.bf16.msra.mxu0 %v1397
    %1703 = vmatprep.subr.bf16.mxu0 0
    %1704 = vmatpush1.bf16.msra.mxu0 %v1398
    %1705 = vmatprep.subr.bf16.mxu0 0
    %1706 = vmatpush1.bf16.msra.mxu0 %v1399
    %1707 = vmatprep.subr.bf16.mxu0 0
    %1708 = vmatpush1.bf16.msra.mxu0 %v1400
    %1709 = vmatprep.subr.bf16.mxu0 0
    %1710 = vmatpush1.bf16.msra.mxu0 %v1401
    %1711 = vmatprep.subr.bf16.mxu0 0
    %1712 = vmatpush1.bf16.msra.mxu0 %v1402
    %1713 = vmatprep.subr.bf16.mxu0 0
    %1714 = vmatpush1.bf16.msra.mxu0 %v1403
    %1715 = vmatprep.subr.bf16.mxu0 0
    %1716 = vmatpush1.bf16.msra.mxu0 %v1404
    %1717 = vmatprep.subr.bf16.mxu0 0
    %1718 = vmatpush1.bf16.msra.mxu0 %v1405
    %1719 = vmatprep.subr.bf16.mxu0 0
    %1720 = vmatpush1.bf16.msra.mxu0 %v1406
    %1721 = vmatprep.subr.bf16.mxu0 0
    %1722 = vmatpush1.bf16.msra.mxu0 %v1407
    %1723 = vmatprep.subr.bf16.mxu0 0
    %1724 = vmatpush1.bf16.msra.mxu0 %v1408
    %1725 = vmatprep.subr.bf16.mxu0 0
    %1726 = vmatpush1.bf16.msra.mxu0 %v1409
    %1727 = vmatprep.subr.bf16.mxu0 0
    %1728 = vmatpush1.bf16.msra.mxu0 %v1410
    %1729 = vmatprep.subr.bf16.mxu0 0
    %1730 = vmatpush1.bf16.msra.mxu0 %v1411
    %1731 = vmatprep.subr.bf16.mxu0 0
    %1732 = vmatpush1.bf16.msra.mxu0 %v1412
    %1733 = vmatprep.mubr.bf16.mxu0 %v579
    %1734 = vmatmul.mubr.bf16.gmra.mrb[0].mxu0 %v578
    %v1735 = vpop.f32.mrb[0].mxu0
    %v1736 = vadd.f32 %v1696, %v1735
    %v1737 = vpop.f32.mrb[0].mxu0
    %v1738 = vpop.f32.mrb[0].mxu0
    %v1739 = vpop.f32.mrb[0].mxu0
    %1740 = vdwg.mxu0
    %1741 = vmatprep.subr.bf16.mxu0 0
    %1742 = vmatpush1.bf16.msra.mxu0 %v1413
    %1743 = vmatprep.subr.bf16.mxu0 0
    %1744 = vmatpush1.bf16.msra.mxu0 %v1414
    %1745 = vmatprep.subr.bf16.mxu0 0
    %1746 = vmatpush1.bf16.msra.mxu0 %v1415
    %1747 = vmatprep.subr.bf16.mxu0 0
    %1748 = vmatpush1.bf16.msra.mxu0 %v1416
    %1749 = vmatprep.subr.bf16.mxu0 0
    %1750 = vmatpush1.bf16.msra.mxu0 %v1417
    %1751 = vmatprep.subr.bf16.mxu0 0
    %1752 = vmatpush1.bf16.msra.mxu0 %v1418
    %1753 = vmatprep.subr.bf16.mxu0 0
    %1754 = vmatpush1.bf16.msra.mxu0 %v1419
    %1755 = vmatprep.subr.bf16.mxu0 0
    %1756 = vmatpush1.bf16.msra.mxu0 %v1420
    %1757 = vmatprep.subr.bf16.mxu0 0
    %1758 = vmatpush1.bf16.msra.mxu0 %v1421
    %1759 = vmatprep.subr.bf16.mxu0 0
    %1760 = vmatpush1.bf16.msra.mxu0 %v1422
    %1761 = vmatprep.subr.bf16.mxu0 0
    %1762 = vmatpush1.bf16.msra.mxu0 %v1423
    %1763 = vmatprep.subr.bf16.mxu0 0
    %1764 = vmatpush1.bf16.msra.mxu0 %v1424
    %1765 = vmatprep.subr.bf16.mxu0 0
    %1766 = vmatpush1.bf16.msra.mxu0 %v1425
    %1767 = vmatprep.subr.bf16.mxu0 0
    %1768 = vmatpush1.bf16.msra.mxu0 %v1426
    %1769 = vmatprep.subr.bf16.mxu0 0
    %1770 = vmatpush1.bf16.msra.mxu0 %v1427
    %1771 = vmatprep.subr.bf16.mxu0 0
    %1772 = vmatpush1.bf16.msra.mxu0 %v1428
    %1773 = vmatprep.mubr.bf16.mxu0 %v581
    %1774 = vmatmul.mubr.bf16.gmra.mrb[0].mxu0 %v580
    %v1775 = vpop.f32.mrb[0].mxu0
    %v1776 = vadd.f32 %v1736, %v1775
    %v1777 = vpop.f32.mrb[0].mxu0
    %v1778 = vpop.f32.mrb[0].mxu0
    %v1779 = vpop.f32.mrb[0].mxu0
    %1780 = vdwg.mxu0
    %1781 = vmatprep.subr.bf16.mxu0 0
    %1782 = vmatpush1.bf16.msra.mxu0 %v1429
    %1783 = vmatprep.subr.bf16.mxu0 0
    %1784 = vmatpush1.bf16.msra.mxu0 %v1430
    %1785 = vmatprep.subr.bf16.mxu0 0
    %1786 = vmatpush1.bf16.msra.mxu0 %v1431
    %1787 = vmatprep.subr.bf16.mxu0 0
    %1788 = vmatpush1.bf16.msra.mxu0 %v1432
    %1789 = vmatprep.subr.bf16.mxu0 0
    %1790 = vmatpush1.bf16.msra.mxu0 %v1433
    %1791 = vmatprep.subr.bf16.mxu0 0
    %1792 = vmatpush1.bf16.msra.mxu0 %v1434
    %1793 = vmatprep.subr.bf16.mxu0 0
    %1794 = vmatpush1.bf16.msra.mxu0 %v1435
    %1795 = vmatprep.subr.bf16.mxu0 0
    %1796 = vmatpush1.bf16.msra.mxu0 %v1436
    %1797 = vmatprep.subr.bf16.mxu0 0
    %1798 = vmatpush1.bf16.msra.mxu0 %v1437
    %1799 = vmatprep.subr.bf16.mxu0 0
    %1800 = vmatpush1.bf16.msra.mxu0 %v1438
    %1801 = vmatprep.subr.bf16.mxu0 0
    %1802 = vmatpush1.bf16.msra.mxu0 %v1439
    %1803 = vmatprep.subr.bf16.mxu0 0
    %1804 = vmatpush1.bf16.msra.mxu0 %v1440
    %1805 = vmatprep.subr.bf16.mxu0 0
    %1806 = vmatpush1.bf16.msra.mxu0 %v1441
    %1807 = vmatprep.subr.bf16.mxu0 0
    %1808 = vmatpush1.bf16.msra.mxu0 %v1442
    %1809 = vmatprep.subr.bf16.mxu0 0
    %1810 = vmatpush1.bf16.msra.mxu0 %v1443
    %1811 = vmatprep.subr.bf16.mxu0 0
    %1812 = vmatpush1.bf16.msra.mxu0 %v1444
    %1813 = vmatprep.mubr.bf16.mxu0 %v583
    %1814 = vmatmul.mubr.bf16.gmra.mrb[0].mxu0 %v582
    %v1815 = vpop.f32.mrb[0].mxu0
    %v1816 = vadd.f32 %v1776, %v1815
    %v1817 = vpop.f32.mrb[0].mxu0
    %v1818 = vpop.f32.mrb[0].mxu0
    %v1819 = vpop.f32.mrb[0].mxu0
    %1820 = vdwg.mxu0
    %1821 = vmatprep.subr.bf16.mxu0 0
    %1822 = vmatpush1.bf16.msra.mxu0 %v1445
    %1823 = vmatprep.subr.bf16.mxu0 0
    %1824 = vmatpush1.bf16.msra.mxu0 %v1446
    %1825 = vmatprep.subr.bf16.mxu0 0
    %1826 = vmatpush1.bf16.msra.mxu0 %v1447
    %1827 = vmatprep.subr.bf16.mxu0 0
    %1828 = vmatpush1.bf16.msra.mxu0 %v1448
    %1829 = vmatprep.subr.bf16.mxu0 0
    %1830 = vmatpush1.bf16.msra.mxu0 %v1449
    %1831 = vmatprep.subr.bf16.mxu0 0
    %1832 = vmatpush1.bf16.msra.mxu0 %v1450
    %1833 = vmatprep.subr.bf16.mxu0 0
    %1834 = vmatpush1.bf16.msra.mxu0 %v1451
    %1835 = vmatprep.subr.bf16.mxu0 0
    %1836 = vmatpush1.bf16.msra.mxu0 %v1452
    %1837 = vmatprep.subr.bf16.mxu0 0
    %1838 = vmatpush1.bf16.msra.mxu0 %v1453
    %1839 = vmatprep.subr.bf16.mxu0 0
    %1840 = vmatpush1.bf16.msra.mxu0 %v1454
    %1841 = vmatprep.subr.bf16.mxu0 0
    %1842 = vmatpush1.bf16.msra.mxu0 %v1455
    %1843 = vmatprep.subr.bf16.mxu0 0
    %1844 = vmatpush1.bf16.msra.mxu0 %v1456
    %1845 = vmatprep.subr.bf16.mxu0 0
    %1846 = vmatpush1.bf16.msra.mxu0 %v1457
    %1847 = vmatprep.subr.bf16.mxu0 0
    %1848 = vmatpush1.bf16.msra.mxu0 %v1458
    %1849 = vmatprep.subr.bf16.mxu0 0
    %1850 = vmatpush1.bf16.msra.mxu0 %v1459
    %1851 = vmatprep.subr.bf16.mxu0 0
    %1852 = vmatpush1.bf16.msra.mxu0 %v1460
    %1853 = vmatprep.mubr.bf16.mxu0 %v585
    %1854 = vmatmul.mubr.bf16.gmra.mrb[0].mxu0 %v584
    %v1855 = vpop.f32.mrb[0].mxu0
    %v1856 = vadd.f32 %v1816, %v1855
    %v1857 = vpop.f32.mrb[0].mxu0
    %v1858 = vpop.f32.mrb[0].mxu0
    %v1859 = vpop.f32.mrb[0].mxu0
    %1860 = vdwg.mxu0
    %1861 = vmatprep.subr.bf16.mxu0 0
    %1862 = vmatpush1.bf16.msra.mxu0 %v1461
    %1863 = vmatprep.subr.bf16.mxu0 0
    %1864 = vmatpush1.bf16.msra.mxu0 %v1462
    %1865 = vmatprep.subr.bf16.mxu0 0
    %1866 = vmatpush1.bf16.msra.mxu0 %v1463
    %1867 = vmatprep.subr.bf16.mxu0 0
    %1868 = vmatpush1.bf16.msra.mxu0 %v1464
    %1869 = vmatprep.subr.bf16.mxu0 0
    %1870 = vmatpush1.bf16.msra.mxu0 %v1465
    %1871 = vmatprep.subr.bf16.mxu0 0
    %1872 = vmatpush1.bf16.msra.mxu0 %v1466
    %1873 = vmatprep.subr.bf16.mxu0 0
    %1874 = vmatpush1.bf16.msra.mxu0 %v1467
    %1875 = vmatprep.subr.bf16.mxu0 0
    %1876 = vmatpush1.bf16.msra.mxu0 %v1468
    %1877 = vmatprep.subr.bf16.mxu0 0
    %1878 = vmatpush1.bf16.msra.mxu0 %v1469
    %1879 = vmatprep.subr.bf16.mxu0 0
    %1880 = vmatpush1.bf16.msra.mxu0 %v1470
    %1881 = vmatprep.subr.bf16.mxu0 0
    %1882 = vmatpush1.bf16.msra.mxu0 %v1471
    %1883 = vmatprep.subr.bf16.mxu0 0
    %1884 = vmatpush1.bf16.msra.mxu0 %v1472
    %1885 = vmatprep.subr.bf16.mxu0 0
    %1886 = vmatpush1.bf16.msra.mxu0 %v1473
    %1887 = vmatprep.subr.bf16.mxu0 0
    %1888 = vmatpush1.bf16.msra.mxu0 %v1474
    %1889 = vmatprep.subr.bf16.mxu0 0
    %1890 = vmatpush1.bf16.msra.mxu0 %v1475
    %1891 = vmatprep.subr.bf16.mxu0 0
    %1892 = vmatpush1.bf16.msra.mxu0 %v1476
    %1893 = vmatprep.mubr.bf16.mxu0 %v587
    %1894 = vmatmul.mubr.bf16.gmra.mrb[0].mxu0 %v586
    %v1895 = vpop.f32.mrb[0].mxu0
    %v1896 = vadd.f32 %v1856, %v1895
    %v1897 = vpop.f32.mrb[0].mxu0
    %v1898 = vpop.f32.mrb[0].mxu0
    %v1899 = vpop.f32.mrb[0].mxu0
    %1900 = vdwg.mxu0
    %1901 = vmatprep.subr.bf16.mxu0 0
    %1902 = vmatpush1.bf16.msra.mxu0 %v1477
    %1903 = vmatprep.subr.bf16.mxu0 0
    %1904 = vmatpush1.bf16.msra.mxu0 %v1478
    %1905 = vmatprep.subr.bf16.mxu0 0
    %1906 = vmatpush1.bf16.msra.mxu0 %v1479
    %1907 = vmatprep.subr.bf16.mxu0 0
    %1908 = vmatpush1.bf16.msra.mxu0 %v1480
    %1909 = vmatprep.subr.bf16.mxu0 0
    %1910 = vmatpush1.bf16.msra.mxu0 %v1481
    %1911 = vmatprep.subr.bf16.mxu0 0
    %1912 = vmatpush1.bf16.msra.mxu0 %v1482
    %1913 = vmatprep.subr.bf16.mxu0 0
    %1914 = vmatpush1.bf16.msra.mxu0 %v1483
    %1915 = vmatprep.subr.bf16.mxu0 0
    %1916 = vmatpush1.bf16.msra.mxu0 %v1484
    %1917 = vmatprep.subr.bf16.mxu0 0
    %1918 = vmatpush1.bf16.msra.mxu0 %v1485
    %1919 = vmatprep.subr.bf16.mxu0 0
    %1920 = vmatpush1.bf16.msra.mxu0 %v1486
    %1921 = vmatprep.subr.bf16.mxu0 0
    %1922 = vmatpush1.bf16.msra.mxu0 %v1487
    %1923 = vmatprep.subr.bf16.mxu0 0
    %1924 = vmatpush1.bf16.msra.mxu0 %v1488
    %1925 = vmatprep.subr.bf16.mxu0 0
    %1926 = vmatpush1.bf16.msra.mxu0 %v1489
    %1927 = vmatprep.subr.bf16.mxu0 0
    %1928 = vmatpush1.bf16.msra.mxu0 %v1490
    %1929 = vmatprep.subr.bf16.mxu0 0
    %1930 = vmatpush1.bf16.msra.mxu0 %v1491
    %1931 = vmatprep.subr.bf16.mxu0 0
    %1932 = vmatpush1.bf16.msra.mxu0 %v1492
    %1933 = vmatprep.mubr.bf16.mxu0 %v589
    %1934 = vmatmul.mubr.bf16.gmra.mrb[0].mxu0 %v588
    %v1935 = vpop.f32.mrb[0].mxu0
    %v1936 = vadd.f32 %v1896, %v1935
    %v1937 = vpop.f32.mrb[0].mxu0
    %v1938 = vpop.f32.mrb[0].mxu0
    %v1939 = vpop.f32.mrb[0].mxu0
    %1940 = vdwg.mxu0
    %v1941 = vmax.f32 %v1936, 0.0
    %1942 = vst [vmem:[#allocation4] sm:$0x3] %v1941
    %v1943 = vpack.c.bf16 %v1941, %v1941
    %v1944 = vld [vmem:[%s6] sm:$0xf]
    %v1945 = vld [vmem:[%s6 + $0x4] sm:$0xf]
    %v1946 = vld [vmem:[%s6 + $0x8] sm:$0xf]
    %v1947 = vld [vmem:[%s6 + $0xc] sm:$0xf]
    %v1948 = vld [vmem:[%s6 + $0x10] sm:$0xf]
    %v1949 = vld [vmem:[%s6 + $0x14] sm:$0xf]
    %v1950 = vld [vmem:[%s6 + $0x18] sm:$0xf]
    %v1951 = vld [vmem:[%s6 + $0x1c] sm:$0xf]
    %v1952 = vld [vmem:[%s6 + $0x20] sm:$0xf]
    %v1953 = vld [vmem:[%s6 + $0x24] sm:$0xf]
    %v1954 = vld [vmem:[%s6 + $0x28] sm:$0xf]
    %v1955 = vld [vmem:[%s6 + $0x2c] sm:$0xf]
    %v1956 = vld [vmem:[%s6 + $0x30] sm:$0xf]
    %v1957 = vld [vmem:[%s6 + $0x34] sm:$0xf]
    %v1958 = vld [vmem:[%s6 + $0x38] sm:$0xf]
    %v1959 = vld [vmem:[%s6 + $0x3c] sm:$0xf]
    %v1960 = vld [vmem:[%s7] sm:$0x1]
    %v1962 = vlaneseq
    %v1963 = vshrl.u32 %v1962, 7
    %v1964 = vsub.s32 0, %v1963
    %v1965 = vrot.slane %v1960, %v1964
    %v1983 = vunpack.c.l.b16 %v1944
    %v1984 = vunpack.c.l.b16 %v1945
    %v1985 = vunpack.c.l.b16 %v1946
    %v1986 = vunpack.c.l.b16 %v1947
    %v1987 = vunpack.c.l.b16 %v1948
    %v1988 = vunpack.c.l.b16 %v1949
    %v1989 = vunpack.c.l.b16 %v1950
    %v1990 = vunpack.c.l.b16 %v1951
    %v1991 = vunpack.c.l.b16 %v1952
    %v1992 = vunpack.c.l.b16 %v1953
    %v1993 = vunpack.c.l.b16 %v1954
    %v1994 = vunpack.c.l.b16 %v1955
    %v1995 = vunpack.c.l.b16 %v1956
    %v1996 = vunpack.c.l.b16 %v1957
    %v1997 = vunpack.c.l.b16 %v1958
    %v1998 = vunpack.c.l.b16 %v1959
    %v1999 = vpack.c.b16 %v1984, %v1983
    %v2000 = vpack.c.b16 %v1986, %v1985
    %v2001 = vpack.c.b16 %v1988, %v1987
    %v2002 = vpack.c.b16 %v1990, %v1989
    %v2003 = vpack.c.b16 %v1992, %v1991
    %v2004 = vpack.c.b16 %v1994, %v1993
    %v2005 = vpack.c.b16 %v1996, %v1995
    %v2006 = vpack.c.b16 %v1998, %v1997
    %2015 = vmatprep.subr.bf16.mxu0 0
    %2016 = vmatpush1.bf16.msra.mxu0 %v1999
    %2017 = vmatprep.subr.bf16.mxu0 0
    %2018 = vmatpush1.bf16.msra.mxu0 %v2000
    %2019 = vmatprep.subr.bf16.mxu0 0
    %2020 = vmatpush1.bf16.msra.mxu0 %v2001
    %2021 = vmatprep.subr.bf16.mxu0 0
    %2022 = vmatpush1.bf16.msra.mxu0 %v2002
    %2023 = vmatprep.subr.bf16.mxu0 0
    %2024 = vmatpush1.bf16.msra.mxu0 %v2003
    %2025 = vmatprep.subr.bf16.mxu0 0
    %2026 = vmatpush1.bf16.msra.mxu0 %v2004
    %2027 = vmatprep.subr.bf16.mxu0 0
    %2028 = vmatpush1.bf16.msra.mxu0 %v2005
    %2029 = vmatprep.subr.bf16.mxu0 0
    %2030 = vmatpush1.bf16.msra.mxu0 %v2006
    %2031 = vmatprep.subr.bf16.mxu0 0
    %2032 = vmatpush1.bf16.msra.mxu0 0
    %2033 = vmatprep.subr.bf16.mxu0 0
    %2034 = vmatpush1.bf16.msra.mxu0 0
    %2035 = vmatprep.subr.bf16.mxu0 0
    %2036 = vmatpush1.bf16.msra.mxu0 0
    %2037 = vmatprep.subr.bf16.mxu0 0
    %2038 = vmatpush1.bf16.msra.mxu0 0
    %2039 = vmatprep.subr.bf16.mxu0 0
    %2040 = vmatpush1.bf16.msra.mxu0 0
    %2041 = vmatprep.subr.bf16.mxu0 0
    %2042 = vmatpush1.bf16.msra.mxu0 0
    %2043 = vmatprep.subr.bf16.mxu0 0
    %2044 = vmatpush1.bf16.msra.mxu0 0
    %2045 = vmatprep.subr.bf16.mxu0 0
    %2046 = vmatpush1.bf16.msra.mxu0 0
    %2047 = vmatprep.mubr.bf16.mxu0 0
    %2048 = vmatmul.mubr.bf16.gmra.mrb[0].mxu0 %v1943
    %v2049 = vpop.f32.mrb[0].mxu0
    %v2050 = vadd.f32 %v1965, %v2049
    %v2051 = vpop.f32.mrb[0].mxu0
    %v2052 = vpop.f32.mrb[0].mxu0
    %v2053 = vpop.f32.mrb[0].mxu0
    %2054 = vdwg.mxu0
    %v2055 = vmax.f32 %v2050, 0.0
    %2056 = vst [vmem:[#allocation6] sm:$0x3] %v2055
    %v2057 = vpack.c.bf16 %v2055, %v2055
    %v2058 = vld [vmem:[%s8] sm:$0xf]
    %v2059 = vld [vmem:[%s8 + $0x4] sm:$0xf]
    %v2060 = vld [vmem:[%s8 + $0x8] sm:$0xf]
    %v2061 = vld [vmem:[%s8 + $0xc] sm:$0xf]
    %v2062 = vld [vmem:[%s8 + $0x10] sm:$0xf]
    %v2063 = vld [vmem:[%s8 + $0x14] sm:$0xf]
    %v2064 = vld [vmem:[%s8 + $0x18] sm:$0xf]
    %v2065 = vld [vmem:[%s8 + $0x1c] sm:$0xf]
    %v2066 = vld [vmem:[%s8 + $0x20] sm:$0xf]
    %v2067 = vld [vmem:[%s8 + $0x24] sm:$0xf]
    %v2068 = vld [vmem:[%s8 + $0x28] sm:$0xf]
    %v2069 = vld [vmem:[%s8 + $0x2c] sm:$0xf]
    %v2070 = vld [vmem:[%s8 + $0x30] sm:$0xf]
    %v2071 = vld [vmem:[%s8 + $0x34] sm:$0xf]
    %v2072 = vld [vmem:[%s8 + $0x38] sm:$0xf]
    %v2073 = vld [vmem:[%s8 + $0x3c] sm:$0xf]
    %v2074 = vld [vmem:[%s9] sm:$0x1]
    %v2076 = vlaneseq
    %v2077 = vshrl.u32 %v2076, 7
    %v2078 = vsub.s32 0, %v2077
    %v2079 = vrot.slane %v2074, %v2078
    %v2097 = vunpack.c.l.b16 %v2058
    %v2098 = vunpack.c.l.b16 %v2059
    %v2099 = vunpack.c.l.b16 %v2060
    %v2100 = vunpack.c.l.b16 %v2061
    %v2101 = vunpack.c.l.b16 %v2062
    %v2102 = vunpack.c.l.b16 %v2063
    %v2103 = vunpack.c.l.b16 %v2064
    %v2104 = vunpack.c.l.b16 %v2065
    %v2105 = vunpack.c.l.b16 %v2066
    %v2106 = vunpack.c.l.b16 %v2067
    %v2107 = vunpack.c.l.b16 %v2068
    %v2108 = vunpack.c.l.b16 %v2069
    %v2109 = vunpack.c.l.b16 %v2070
    %v2110 = vunpack.c.l.b16 %v2071
    %v2111 = vunpack.c.l.b16 %v2072
    %v2112 = vunpack.c.l.b16 %v2073
    %v2113 = vpack.c.b16 %v2098, %v2097
    %v2114 = vpack.c.b16 %v2100, %v2099
    %v2115 = vpack.c.b16 %v2102, %v2101
    %v2116 = vpack.c.b16 %v2104, %v2103
    %v2117 = vpack.c.b16 %v2106, %v2105
    %v2118 = vpack.c.b16 %v2108, %v2107
    %v2119 = vpack.c.b16 %v2110, %v2109
    %v2120 = vpack.c.b16 %v2112, %v2111
    %2129 = vmatprep.subr.bf16.mxu0 0
    %2130 = vmatpush1.bf16.msra.mxu0 %v2113
    %2131 = vmatprep.subr.bf16.mxu0 0
    %2132 = vmatpush1.bf16.msra.mxu0 %v2114
    %2133 = vmatprep.subr.bf16.mxu0 0
    %2134 = vmatpush1.bf16.msra.mxu0 %v2115
    %2135 = vmatprep.subr.bf16.mxu0 0
    %2136 = vmatpush1.bf16.msra.mxu0 %v2116
    %2137 = vmatprep.subr.bf16.mxu0 0
    %2138 = vmatpush1.bf16.msra.mxu0 %v2117
    %2139 = vmatprep.subr.bf16.mxu0 0
    %2140 = vmatpush1.bf16.msra.mxu0 %v2118
    %2141 = vmatprep.subr.bf16.mxu0 0
    %2142 = vmatpush1.bf16.msra.mxu0 %v2119
    %2143 = vmatprep.subr.bf16.mxu0 0
    %2144 = vmatpush1.bf16.msra.mxu0 %v2120
    %2145 = vmatprep.subr.bf16.mxu0 0
    %2146 = vmatpush1.bf16.msra.mxu0 0
    %2147 = vmatprep.subr.bf16.mxu0 0
    %2148 = vmatpush1.bf16.msra.mxu0 0
    %2149 = vmatprep.subr.bf16.mxu0 0
    %2150 = vmatpush1.bf16.msra.mxu0 0
    %2151 = vmatprep.subr.bf16.mxu0 0
    %2152 = vmatpush1.bf16.msra.mxu0 0
    %2153 = vmatprep.subr.bf16.mxu0 0
    %2154 = vmatpush1.bf16.msra.mxu0 0
    %2155 = vmatprep.subr.bf16.mxu0 0
    %2156 = vmatpush1.bf16.msra.mxu0 0
    %2157 = vmatprep.subr.bf16.mxu0 0
    %2158 = vmatpush1.bf16.msra.mxu0 0
    %2159 = vmatprep.subr.bf16.mxu0 0
    %2160 = vmatpush1.bf16.msra.mxu0 0
    %2161 = vmatprep.mubr.bf16.mxu0 0
    %2162 = vmatmul.mubr.bf16.gmra.mrb[0].mxu0 %v2057
    %v2163 = vpop.f32.mrb[0].mxu0
    %v2164 = vadd.f32 %v2079, %v2163
    %v2165 = vpop.f32.mrb[0].mxu0
    %v2166 = vpop.f32.mrb[0].mxu0
    %v2167 = vpop.f32.mrb[0].mxu0
    %2168 = vdwg.mxu0
    %2169 = vst [vmem:[#allocation7] sm:$0x3] %v2164
    // Predicated region
    $region42: #{modified_lenet5_forward.3} parent=1 // pred_check
      _
    $region43: #{modified_lenet5_forward.3} parent=1 // pred_check_branch
      %2171 = sbr.rel (0) target = $region45
    $region44: #{modified_lenet5_forward.3} parent=1 // pred_region
      %s2173 = ssub.s32 512, 512
      %2174 = vsyncadd [#allocation3], %s2173
      %s2175 = sshll.u32 [#allocation2], 4
      %s2176 = int_to_ptr.vmem [resolvable:$true] %s2175
      %2181 = dma.vmem_to_hbm [thread:$0]  %s2176, 512, %s10, [#allocation3], 128, 128, 8
    $region45: #{modified_lenet5_forward.3} parent=1 // pred_fallthru
      _
    // Predicated region
    $region46: #{modified_lenet5_forward.3} parent=1 // pred_check
      _
    $region47: #{modified_lenet5_forward.3} parent=1 // pred_check_branch
      %2183 = sbr.rel (0) target = $region49
    $region48: #{modified_lenet5_forward.3} parent=1 // pred_region
      %s2185 = ssub.s32 32, 32
      %2186 = vsyncadd [#allocation5], %s2185
      %s2188 = sshll.u32 [#allocation4], 4
      %s2189 = int_to_ptr.vmem [resolvable:$true] %s2188
      %2191 = dma.vmem_to_hbm [thread:$0]  %s2189, 32, %s11, [#allocation5]
    $region49: #{modified_lenet5_forward.3} parent=1 // pred_fallthru
      _
    // Predicated region
    $region50: #{modified_lenet5_forward.3} parent=1 // pred_check
      _
    $region51: #{modified_lenet5_forward.3} parent=1 // pred_check_branch
      %2193 = sbr.rel (0) target = $region53
    $region52: #{modified_lenet5_forward.3} parent=1 // pred_region
      %s2195 = ssub.s32 32, 32
      %2196 = vsyncadd [#allocation5], %s2195
      %s2198 = sshll.u32 [#allocation6], 4
      %s2199 = int_to_ptr.vmem [resolvable:$true] %s2198
      %2201 = dma.vmem_to_hbm [thread:$0]  %s2199, 32, %s12, [#allocation5]
    $region53: #{modified_lenet5_forward.3} parent=1 // pred_fallthru
      _
    // Predicated region
    $region54: #{modified_lenet5_forward.3} parent=1 // pred_check
      _
    $region55: #{modified_lenet5_forward.3} parent=1 // pred_check_branch
      %2203 = sbr.rel (0) target = $region57
    $region56: #{modified_lenet5_forward.3} parent=1 // pred_region
      %s2205 = ssub.s32 32, 32
      %2206 = vsyncadd [#allocation8], %s2205
      %s2208 = sshll.u32 [#allocation7], 4
      %s2209 = int_to_ptr.vmem [resolvable:$true] %s2208
      %2211 = dma.vmem_to_hbm [thread:$0]  %s2209, 32, %s13, [#allocation8]
    $region57: #{modified_lenet5_forward.3} parent=1 // pred_fallthru
      _
    // Predicated region
    $region58: #{modified_lenet5_forward.3} parent=1 // pred_check
      _
    $region59: #{modified_lenet5_forward.3} parent=1 // pred_check_branch
      %2213 = sbr.rel (0) target = $region61
    $region60: #{modified_lenet5_forward.3} parent=1 // pred_region
      %2214 = dma.done [#allocation3], 512
    $region61: #{modified_lenet5_forward.3} parent=1 // pred_fallthru
      _
    // Predicated region
    $region62: #{modified_lenet5_forward.3} parent=1 // pred_check
      _
    $region63: #{modified_lenet5_forward.3} parent=1 // pred_check_branch
      %2216 = sbr.rel (0) target = $region65
    $region64: #{modified_lenet5_forward.3} parent=1 // pred_region
      %2217 = dma.done [#allocation5], 32
    $region65: #{modified_lenet5_forward.3} parent=1 // pred_fallthru
      _
    // Predicated region
    $region66: #{modified_lenet5_forward.3} parent=1 // pred_check
      _
    $region67: #{modified_lenet5_forward.3} parent=1 // pred_check_branch
      %2219 = sbr.rel (0) target = $region69
    $region68: #{modified_lenet5_forward.3} parent=1 // pred_region
      %2220 = dma.done [#allocation5], 32
    $region69: #{modified_lenet5_forward.3} parent=1 // pred_fallthru
      _
    // Predicated region
    $region70: #{modified_lenet5_forward.3} parent=1 // pred_check
      _
    $region71: #{modified_lenet5_forward.3} parent=1 // pred_check_branch
      %2222 = sbr.rel (0) target = $region73
    $region72: #{modified_lenet5_forward.3} parent=1 // pred_region
      %2223 = dma.done [#allocation8], 32
    $region73: #{modified_lenet5_forward.3} parent=1 // pred_fallthru
      _
    %2224 = vsyncpa [#allocation3], 1
    %2225 = vsyncpa [#allocation5], 1
    %2226 = vsyncpa [#allocation8], 1

</llo_original>
